<compile_context>
chip_gen: v6e
topology: v6e:2x2x1
jax: 0.10.0
libtpu: 0.0.40
codegen_flags: <defaults>
</compile_context>

<pallas_src>
import functools
import math

import jax
import jax.numpy as jnp
from jax import lax
from jax.experimental import pallas as pl
from jax.experimental.pallas import tpu as pltpu


def _round_up(x, m):
    return ((x + m - 1) // m) * m


_VMEM = pl.BlockSpec(memory_space=pltpu.MemorySpace.VMEM)

_PROJ_CHUNK_ROWS = 512           # rows per hoisted-projection matmul (bounds vreg pressure)
_GATE_ORDER = (0, 1, 3, 2)       # PyTorch [i, f, g, o]  ->  packed [i, f, o, g]


def _gate_stride(H):
    """Gate stride Hg (== carried state width). Pack contiguously unless per-gate pad is needed."""
    if H < 128 or H % 128 == 0:
        return H
    return _round_up(H, 128)


# ----------------------------------------------------------------------------
# Fused kernel: all LSTM layers + final Linear
# ----------------------------------------------------------------------------
def _make_fused_lstm_kernel(num_layers):
    """kernel(x2d, [wih, whh, b]*L, w_out, b_out, out, xw_sc[, y_sc])."""

    def kernel(*args):
        x_ref = args[0]                                   # (T*Bp, Din0p)
        layer_refs = args[1:1 + 3 * num_layers]           # L x (wih, whh, b)
        w_out_ref = args[1 + 3 * num_layers]              # (Hg, Op)
        b_out_ref = args[2 + 3 * num_layers]              # (1, Op)
        out_ref = args[3 + 3 * num_layers]                # (Bp, Op)
        scratch = args[4 + 3 * num_layers:]
        xw_sc = scratch[0]                                # (T*Bp, 4*Hg)
        y_sc = scratch[1] if len(scratch) > 1 else None   # (T*Bp, Hg) or absent

        TB = x_ref.shape[0]
        Bp, Op = out_ref.shape
        T = TB // Bp
        Hg = xw_sc.shape[1] // 4

        h_last = None
        for layer in range(num_layers):
            wih_ref = layer_refs[3 * layer + 0]            # (Din, 4*Hg)
            whh_ref = layer_refs[3 * layer + 1]            # (Hg, 4*Hg)
            b_ref = layer_refs[3 * layer + 2]              # (1, 4*Hg)

            x_src = x_ref if layer == 0 else y_sc          # (T*Bp, Din)
            wih = wih_ref[...]
            bias = b_ref[...]

            # --- hoisted input projection: big MXU matmuls in bounded row chunks, bias folded ---
            for r0 in range(0, TB, _PROJ_CHUNK_ROWS):
                rc = min(_PROJ_CHUNK_ROWS, TB - r0)
                xw_sc[r0:r0 + rc, :] = (
                    jnp.dot(x_src[r0:r0 + rc, :], wih,
                            preferred_element_type=jnp.float32) + bias)

            whh = whh_ref[...]                 # hoist recurrent weight load out of the time loop
            is_last = (layer == num_layers - 1)

            def step(t, carry, whh=whh, is_last=is_last):
                h, c = carry                                           # vreg-resident state
                r = pl.multiple_of(t * Bp, 8)
                gates = xw_sc[pl.ds(r, Bp), :] + jnp.dot(
                    h, whh, preferred_element_type=jnp.float32)        # (Bp, 4*Hg)
                # packed gate order [i, f, o, g]: one sigmoid over the first 3 blocks
                sig = jax.nn.sigmoid(gates[:, :3 * Hg])
                i_g = sig[:, 0 * Hg:1 * Hg]
                f_g = sig[:, 1 * Hg:2 * Hg]
                o_g = sig[:, 2 * Hg:3 * Hg]
                g_g = jnp.tanh(gates[:, 3 * Hg:4 * Hg])
                c_new = f_g * c + i_g * g_g
                h_new = o_g * jnp.tanh(c_new)
                if not is_last:                 # last layer's sequence is never consumed
                    y_sc[pl.ds(r, Bp), :] = h_new
                return (h_new, c_new)

            zeros = jnp.zeros((Bp, Hg), jnp.float32)
            unroll = True if T <= 16 else 2
            h_last, _ = lax.fori_loop(0, T, step, (zeros, zeros), unroll=unroll)

        # --- fused final Linear on hn[-1] (lane-dense (Bp, Op) store) ---
        out_ref[...] = (jnp.dot(h_last, w_out_ref[...],
                                preferred_element_type=jnp.float32)
                        + b_out_ref[...])

    return kernel


# ----------------------------------------------------------------------------
# Parameter init (PyTorch layout) + packing (transpose, reorder gates, combine bias, pad)
# ----------------------------------------------------------------------------
def init_lstm_model_params(key, input_dim, hidden_dim, layer_dim, output_dim):
    """PyTorch-shaped params: U(-1/sqrt(H), 1/sqrt(H))."""
    raw = {"layers": []}
    bound = 1.0 / math.sqrt(hidden_dim)
    for layer in range(layer_dim):
        din = input_dim if layer == 0 else hidden_dim
        key, k1, k2, k3, k4 = jax.random.split(key, 5)
        raw["layers"].append(dict(
            w_ih=jax.random.uniform(k1, (4 * hidden_dim, din), jnp.float32, -bound, bound),
            w_hh=jax.random.uniform(k2, (4 * hidden_dim, hidden_dim), jnp.float32, -bound, bound),
            b_ih=jax.random.uniform(k3, (4 * hidden_dim,), jnp.float32, -bound, bound),
            b_hh=jax.random.uniform(k4, (4 * hidden_dim,), jnp.float32, -bound, bound),
        ))
    key, k1, k2 = jax.random.split(key, 3)
    raw["w_out"] = jax.random.uniform(k1, (output_dim, hidden_dim), jnp.float32, -bound, bound)
    raw["b_out"] = jax.random.uniform(k2, (output_dim,), jnp.float32, -bound, bound)
    return raw


def _reorder_pad_gates(w, H, Hg):
    """(..., 4*H) PyTorch [i,f,g,o] -> (..., 4*Hg) packed [i,f,o,g]; zero-pad per gate if Hg>H."""
    parts = []
    for k in _GATE_ORDER:
        blk = w[..., k * H:(k + 1) * H]
        if Hg > H:
            pad = [(0, 0)] * (w.ndim - 1) + [(0, Hg - H)]
            blk = jnp.pad(blk, pad)
        parts.append(blk)
    return jnp.concatenate(parts, axis=-1)


def pack_params(raw, input_dim, hidden_dim, output_dim):
    """Pre-transpose, reorder/combine, and pad to aligned shapes (zero pads keep math exact)."""
    H = hidden_dim
    Hg = _gate_stride(H)                       # gate stride == carried state width
    Op = _round_up(output_dim, 128)
    Din0p = _round_up(input_dim, 128)
    packed = {"layers": []}
    for layer, lp in enumerate(raw["layers"]):
        din = input_dim if layer == 0 else H
        din_p = Din0p if layer == 0 else Hg
        wih_t = _reorder_pad_gates(lp["w_ih"].T, H, Hg)                 # (din, 4Hg)
        wih_t = jnp.pad(wih_t, ((0, din_p - din), (0, 0)))              # (din_p, 4Hg)
        whh_t = _reorder_pad_gates(lp["w_hh"].T, H, Hg)                 # (H, 4Hg)
        whh_t = jnp.pad(whh_t, ((0, Hg - H), (0, 0)))                   # (Hg, 4Hg)
        b = _reorder_pad_gates((lp["b_ih"] + lp["b_hh"]).reshape(1, 4 * H), H, Hg)  # (1, 4Hg)
        packed["layers"].append(dict(wih_t=wih_t, whh_t=whh_t, b=b))
    packed["w_out_t"] = jnp.pad(raw["w_out"].T,
                                ((0, Hg - H), (0, Op - output_dim)))    # (Hg, Op)
    packed["b_out"] = jnp.pad(raw["b_out"].reshape(1, output_dim),
                              ((0, 0), (0, Op - output_dim)))           # (1, Op)
    return packed


# ----------------------------------------------------------------------------
# VMEM budget: derive the limit from the (padded) footprint and the chip's physical VMEM
# ----------------------------------------------------------------------------
def _padded_f32_bytes(shape):
    s = list(shape)
    if len(s) == 1:
        return 4 * _round_up(s[0], 128)
    s[-1] = _round_up(s[-1], 128)
    s[-2] = _round_up(s[-2], 8)
    n = 1
    for d in s:
        n *= d
    return 4 * n


def _pick_vmem_limit(shapes):
    required = sum(_padded_f32_bytes(s) for s in shapes)
    try:
        info = pltpu.get_tpu_info()
        cap = int(getattr(info, "vmem_capacity_bytes", 64 * 1024 * 1024))
    except Exception:
        cap = 64 * 1024 * 1024                       # conservative (v7x-sized) fallback
    want = max(32 * 1024 * 1024, int(1.5 * required) + (4 << 20))
    return int(min(want, int(cap * 0.9)))


# ----------------------------------------------------------------------------
# Forward wrapper
# ----------------------------------------------------------------------------
@functools.partial(jax.jit, static_argnames=("num_layers", "output_dim"))
def lstm_model_forward(x, packed, *, num_layers, output_dim):
    """Equivalent of LSTMModel.forward: out = Linear(hn[-1]).  x: (B, T, input_dim)."""
    B, T, Din = x.shape
    Hg = packed["layers"][0]["whh_t"].shape[0]
    Hg4 = packed["layers"][0]["whh_t"].shape[1]
    Op = packed["w_out_t"].shape[1]
    Din0p = packed["layers"][0]["wih_t"].shape[0]
    Bp = _round_up(B, 8)
    TB = T * Bp

    # time-major, pad batch (sublanes) and feature (lanes) with zeros, flatten to 2-D rows
    x_tm = jnp.transpose(x, (1, 0, 2)).astype(jnp.float32)             # (T, B, Din)
    x_tm = jnp.pad(x_tm, ((0, 0), (0, Bp - B), (0, Din0p - Din)))      # (T, Bp, Din0p)
    x2d = x_tm.reshape(TB, Din0p)                                      # (T*Bp, Din0p)

    inputs = [x2d]
    for lp in packed["layers"]:
        inputs += [lp["wih_t"], lp["whh_t"], lp["b"]]
    inputs += [packed["w_out_t"], packed["b_out"]]

    scratch_shapes = [pltpu.VMEM((TB, Hg4), jnp.float32)]              # hoisted input projection
    if num_layers > 1:
        scratch_shapes.append(pltpu.VMEM((TB, Hg), jnp.float32))       # inter-layer hidden seq

    all_shapes = ([tuple(a.shape) for a in inputs]
                  + [(Bp, Op), (TB, Hg4)]
                  + ([(TB, Hg)] if num_layers > 1 else []))
    vmem_limit = _pick_vmem_limit(all_shapes)

    out_padded = pl.pallas_call(
        _make_fused_lstm_kernel(num_layers),
        out_shape=jax.ShapeDtypeStruct((Bp, Op), jnp.float32),
        in_specs=[_VMEM] * len(inputs),
        out_specs=_VMEM,
        scratch_shapes=scratch_shapes,
        compiler_params=pltpu.CompilerParams(vmem_limit_bytes=vmem_limit),
    )(*inputs)
    return out_padded[:B, :output_dim]


# ----------------------------------------------------------------------------
# Pure-JAX reference (PyTorch-layout params, PyTorch gate order)
# ----------------------------------------------------------------------------
def lstm_model_reference(x, raw):
    B = x.shape[0]
    x_tm = jnp.transpose(x, (1, 0, 2)).astype(jnp.float32)
    h_last = None
    for lp in raw["layers"]:
        H = lp["w_hh"].shape[1]
        h = jnp.zeros((B, H), jnp.float32)
        c = jnp.zeros((B, H), jnp.float32)
        ys = []
        for t in range(x_tm.shape[0]):
            gates = x_tm[t] @ lp["w_ih"].T + h @ lp["w_hh"].T + lp["b_ih"] + lp["b_hh"]
            i = jax.nn.sigmoid(gates[:, 0 * H:1 * H])
            f = jax.nn.sigmoid(gates[:, 1 * H:2 * H])
            g = jnp.tanh(gates[:, 2 * H:3 * H])
            o = jax.nn.sigmoid(gates[:, 3 * H:4 * H])
            c = f * c + i * g
            h = o * jnp.tanh(c)
            ys.append(h)
        x_tm = jnp.stack(ys, axis=0)
        h_last = h
    return h_last @ raw["w_out"].T + raw["b_out"]


# ----------------------------------------------------------------------------
if __name__ == "__main__":
    B, T = 2, 8
    input_dim, hidden_dim, layer_dim, output_dim = 16, 32, 2, 4

    key = jax.random.PRNGKey(0)
    key, xk, pk = jax.random.split(key, 3)
    x = jax.random.normal(xk, (B, T, input_dim), jnp.float32)

    raw = init_lstm_model_params(pk, input_dim, hidden_dim, layer_dim, output_dim)
    packed = pack_params(raw, input_dim, hidden_dim, output_dim)

    out = lstm_model_forward(x, packed, num_layers=layer_dim, output_dim=output_dim)
    out = jax.block_until_ready(out)
    assert out.shape == (B, output_dim), out.shape

    ref = lstm_model_reference(x, raw)
    assert jnp.allclose(out, ref, atol=1e-5, rtol=1e-5), (out, ref)

    print("KERNEL_OK")
</pallas_src>

<mosaic_0001>
module attributes {stable_mosaic.version = 11 : i64} {
  func.func @kernel(%arg0: memref<64x128xf32, #tpu.memory_space<vmem>>, %arg1: memref<128x128xf32, #tpu.memory_space<vmem>>, %arg2: memref<32x128xf32, #tpu.memory_space<vmem>>, %arg3: memref<1x128xf32, #tpu.memory_space<vmem>>, %arg4: memref<32x128xf32, #tpu.memory_space<vmem>>, %arg5: memref<32x128xf32, #tpu.memory_space<vmem>>, %arg6: memref<1x128xf32, #tpu.memory_space<vmem>>, %arg7: memref<32x128xf32, #tpu.memory_space<vmem>>, %arg8: memref<1x128xf32, #tpu.memory_space<vmem>>, %arg9: memref<8x128xf32, #tpu.memory_space<vmem>>, %arg10: memref<64x128xf32, #tpu.memory_space<vmem>>, %arg11: memref<64x32xf32, #tpu.memory_space<vmem>>) attributes {dimension_semantics = [], scalar_prefetch = 0 : i64, scratch_operands = 2 : i64, tpu.core_type = #tpu.core_type<tc>} {
    %c0 = arith.constant 0 : index
    %c0_0 = arith.constant 0 : index
    %0 = vector.load %arg1[%c0, %c0_0] : memref<128x128xf32, #tpu.memory_space<vmem>>, vector<128x128xf32>
    %c0_1 = arith.constant 0 : index
    %c0_2 = arith.constant 0 : index
    %1 = vector.load %arg3[%c0_1, %c0_2] : memref<1x128xf32, #tpu.memory_space<vmem>>, vector<1x128xf32>
    %c0_3 = arith.constant 0 : index
    %c0_4 = arith.constant 0 : index
    %2 = vector.load %arg0[%c0_3, %c0_4] : memref<64x128xf32, #tpu.memory_space<vmem>>, vector<64x128xf32>
    %cst = arith.constant dense<0.000000e+00> : vector<64x128xf32>
    %3 = tpu.matmul %2, %0, %cst {dimension_numbers = #tpu.dot_dimension_numbers<[1], [0], [0], [1], [0, 0, 1, 1], [], []>} : vector<64x128xf32>, vector<128x128xf32>, vector<64x128xf32> -> vector<64x128xf32>
    %4 = vector.broadcast %1 : vector<1x128xf32> to vector<64x128xf32>
    %5 = arith.addf %3, %4 : vector<64x128xf32>
    %c0_5 = arith.constant 0 : index
    %c0_6 = arith.constant 0 : index
    %6 = vector.load %arg10[%c0_5, %c0_6] : memref<64x128xf32, #tpu.memory_space<vmem>>, vector<64x128xf32>
    tpu.vector_store %arg10[%c0_5, %c0_6], %5 {strides = array<i32>} : memref<64x128xf32, #tpu.memory_space<vmem>>, vector<64x128xf32>,
    %c0_7 = arith.constant 0 : index
    %c0_8 = arith.constant 0 : index
    %7 = vector.load %arg2[%c0_7, %c0_8] : memref<32x128xf32, #tpu.memory_space<vmem>>, vector<32x128xf32>
    %cst_9 = arith.constant 0.000000e+00 : f32
    %8 = vector.broadcast %cst_9 : f32 to vector<8x32xf32>
    %c0_i32 = arith.constant 0 : i32
    %c8_i32 = arith.constant 8 : i32
    %9 = arith.muli %c0_i32, %c8_i32 : i32
    %10 = tpu.assume_multiple %9, 8 : i32
    %11 = arith.index_cast %10 : i32 to index
    %c0_10 = arith.constant 0 : index
    %12 = vector.load %arg10[%11, %c0_10] : memref<64x128xf32, #tpu.memory_space<vmem>>, vector<8x128xf32>
    %cst_11 = arith.constant dense<0.000000e+00> : vector<8x128xf32>
    %13 = tpu.matmul %8, %7, %cst_11 {dimension_numbers = #tpu.dot_dimension_numbers<[1], [0], [0], [1], [0, 0, 1, 1], [], []>} : vector<8x32xf32>, vector<32x128xf32>, vector<8x128xf32> -> vector<8x128xf32>
    %14 = arith.addf %12, %13 : vector<8x128xf32>
    %15 = vector.extract_strided_slice %14 {offsets = [0, 0], sizes = [8, 96], strides = [1, 1]} : vector<8x128xf32> to vector<8x96xf32>
    %16 = arith.negf %15 : vector<8x96xf32>
    %17 = math.exp %16 : vector<8x96xf32>
    %cst_12 = arith.constant 1.000000e+00 : f32
    %18 = vector.broadcast %cst_12 : f32 to vector<8x96xf32>
    %19 = arith.addf %18, %17 : vector<8x96xf32>
    %20 = arith.divf %18, %19 : vector<8x96xf32>
    %21 = vector.extract_strided_slice %20 {offsets = [0, 0], sizes = [8, 32], strides = [1, 1]} : vector<8x96xf32> to vector<8x32xf32>
    %22 = vector.extract_strided_slice %20 {offsets = [0, 32], sizes = [8, 32], strides = [1, 1]} : vector<8x96xf32> to vector<8x32xf32>
    %23 = vector.extract_strided_slice %20 {offsets = [0, 64], sizes = [8, 32], strides = [1, 1]} : vector<8x96xf32> to vector<8x32xf32>
    %24 = vector.extract_strided_slice %14 {offsets = [0, 96], sizes = [8, 32], strides = [1, 1]} : vector<8x128xf32> to vector<8x32xf32>
    %25 = math.tanh %24 : vector<8x32xf32>
    %26 = arith.mulf %22, %8 : vector<8x32xf32>
    %27 = arith.mulf %21, %25 : vector<8x32xf32>
    %28 = arith.addf %26, %27 : vector<8x32xf32>
    %29 = math.tanh %28 : vector<8x32xf32>
    %30 = arith.mulf %23, %29 : vector<8x32xf32>
    %31 = arith.index_cast %10 : i32 to index
    %c0_13 = arith.constant 0 : index
    %32 = vector.load %arg11[%31, %c0_13] : memref<64x32xf32, #tpu.memory_space<vmem>>, vector<8x32xf32>
    tpu.vector_store %arg11[%31, %c0_13], %30 {strides = array<i32>} : memref<64x32xf32, #tpu.memory_space<vmem>>, vector<8x32xf32>,
    %c1_i32 = arith.constant 1 : i32
    %c8_i32_14 = arith.constant 8 : i32
    %33 = arith.muli %c1_i32, %c8_i32_14 : i32
    %34 = tpu.assume_multiple %33, 8 : i32
    %35 = arith.index_cast %34 : i32 to index
    %c0_15 = arith.constant 0 : index
    %36 = vector.load %arg10[%35, %c0_15] : memref<64x128xf32, #tpu.memory_space<vmem>>, vector<8x128xf32>
    %cst_16 = arith.constant dense<0.000000e+00> : vector<8x128xf32>
    %37 = tpu.matmul %30, %7, %cst_16 {dimension_numbers = #tpu.dot_dimension_numbers<[1], [0], [0], [1], [0, 0, 1, 1], [], []>} : vector<8x32xf32>, vector<32x128xf32>, vector<8x128xf32> -> vector<8x128xf32>
    %38 = arith.addf %36, %37 : vector<8x128xf32>
    %39 = vector.extract_strided_slice %38 {offsets = [0, 0], sizes = [8, 96], strides = [1, 1]} : vector<8x128xf32> to vector<8x96xf32>
    %40 = arith.negf %39 : vector<8x96xf32>
    %41 = math.exp %40 : vector<8x96xf32>
    %cst_17 = arith.constant 1.000000e+00 : f32
    %42 = vector.broadcast %cst_17 : f32 to vector<8x96xf32>
    %43 = arith.addf %42, %41 : vector<8x96xf32>
    %44 = arith.divf %42, %43 : vector<8x96xf32>
    %45 = vector.extract_strided_slice %44 {offsets = [0, 0], sizes = [8, 32], strides = [1, 1]} : vector<8x96xf32> to vector<8x32xf32>
    %46 = vector.extract_strided_slice %44 {offsets = [0, 32], sizes = [8, 32], strides = [1, 1]} : vector<8x96xf32> to vector<8x32xf32>
    %47 = vector.extract_strided_slice %44 {offsets = [0, 64], sizes = [8, 32], strides = [1, 1]} : vector<8x96xf32> to vector<8x32xf32>
    %48 = vector.extract_strided_slice %38 {offsets = [0, 96], sizes = [8, 32], strides = [1, 1]} : vector<8x128xf32> to vector<8x32xf32>
    %49 = math.tanh %48 : vector<8x32xf32>
    %50 = arith.mulf %46, %28 : vector<8x32xf32>
    %51 = arith.mulf %45, %49 : vector<8x32xf32>
    %52 = arith.addf %50, %51 : vector<8x32xf32>
    %53 = math.tanh %52 : vector<8x32xf32>
    %54 = arith.mulf %47, %53 : vector<8x32xf32>
    %55 = arith.index_cast %34 : i32 to index
    %c0_18 = arith.constant 0 : index
    %56 = vector.load %arg11[%55, %c0_18] : memref<64x32xf32, #tpu.memory_space<vmem>>, vector<8x32xf32>
    tpu.vector_store %arg11[%55, %c0_18], %54 {strides = array<i32>} : memref<64x32xf32, #tpu.memory_space<vmem>>, vector<8x32xf32>,
    %c2_i32 = arith.constant 2 : i32
    %c8_i32_19 = arith.constant 8 : i32
    %57 = arith.muli %c2_i32, %c8_i32_19 : i32
    %58 = tpu.assume_multiple %57, 8 : i32
    %59 = arith.index_cast %58 : i32 to index
    %c0_20 = arith.constant 0 : index
    %60 = vector.load %arg10[%59, %c0_20] : memref<64x128xf32, #tpu.memory_space<vmem>>, vector<8x128xf32>
    %cst_21 = arith.constant dense<0.000000e+00> : vector<8x128xf32>
    %61 = tpu.matmul %54, %7, %cst_21 {dimension_numbers = #tpu.dot_dimension_numbers<[1], [0], [0], [1], [0, 0, 1, 1], [], []>} : vector<8x32xf32>, vector<32x128xf32>, vector<8x128xf32> -> vector<8x128xf32>
    %62 = arith.addf %60, %61 : vector<8x128xf32>
    %63 = vector.extract_strided_slice %62 {offsets = [0, 0], sizes = [8, 96], strides = [1, 1]} : vector<8x128xf32> to vector<8x96xf32>
    %64 = arith.negf %63 : vector<8x96xf32>
    %65 = math.exp %64 : vector<8x96xf32>
    %cst_22 = arith.constant 1.000000e+00 : f32
    %66 = vector.broadcast %cst_22 : f32 to vector<8x96xf32>
    %67 = arith.addf %66, %65 : vector<8x96xf32>
    %68 = arith.divf %66, %67 : vector<8x96xf32>
    %69 = vector.extract_strided_slice %68 {offsets = [0, 0], sizes = [8, 32], strides = [1, 1]} : vector<8x96xf32> to vector<8x32xf32>
    %70 = vector.extract_strided_slice %68 {offsets = [0, 32], sizes = [8, 32], strides = [1, 1]} : vector<8x96xf32> to vector<8x32xf32>
    %71 = vector.extract_strided_slice %68 {offsets = [0, 64], sizes = [8, 32], strides = [1, 1]} : vector<8x96xf32> to vector<8x32xf32>
    %72 = vector.extract_strided_slice %62 {offsets = [0, 96], sizes = [8, 32], strides = [1, 1]} : vector<8x128xf32> to vector<8x32xf32>
    %73 = math.tanh %72 : vector<8x32xf32>
    %74 = arith.mulf %70, %52 : vector<8x32xf32>
    %75 = arith.mulf %69, %73 : vector<8x32xf32>
    %76 = arith.addf %74, %75 : vector<8x32xf32>
    %77 = math.tanh %76 : vector<8x32xf32>
    %78 = arith.mulf %71, %77 : vector<8x32xf32>
    %79 = arith.index_cast %58 : i32 to index
    %c0_23 = arith.constant 0 : index
    %80 = vector.load %arg11[%79, %c0_23] : memref<64x32xf32, #tpu.memory_space<vmem>>, vector<8x32xf32>
    tpu.vector_store %arg11[%79, %c0_23], %78 {strides = array<i32>} : memref<64x32xf32, #tpu.memory_space<vmem>>, vector<8x32xf32>,
    %c3_i32 = arith.constant 3 : i32
    %c8_i32_24 = arith.constant 8 : i32
    %81 = arith.muli %c3_i32, %c8_i32_24 : i32
    %82 = tpu.assume_multiple %81, 8 : i32
    %83 = arith.index_cast %82 : i32 to index
    %c0_25 = arith.constant 0 : index
    %84 = vector.load %arg10[%83, %c0_25] : memref<64x128xf32, #tpu.memory_space<vmem>>, vector<8x128xf32>
    %cst_26 = arith.constant dense<0.000000e+00> : vector<8x128xf32>
    %85 = tpu.matmul %78, %7, %cst_26 {dimension_numbers = #tpu.dot_dimension_numbers<[1], [0], [0], [1], [0, 0, 1, 1], [], []>} : vector<8x32xf32>, vector<32x128xf32>, vector<8x128xf32> -> vector<8x128xf32>
    %86 = arith.addf %84, %85 : vector<8x128xf32>
    %87 = vector.extract_strided_slice %86 {offsets = [0, 0], sizes = [8, 96], strides = [1, 1]} : vector<8x128xf32> to vector<8x96xf32>
    %88 = arith.negf %87 : vector<8x96xf32>
    %89 = math.exp %88 : vector<8x96xf32>
    %cst_27 = arith.constant 1.000000e+00 : f32
    %90 = vector.broadcast %cst_27 : f32 to vector<8x96xf32>
    %91 = arith.addf %90, %89 : vector<8x96xf32>
    %92 = arith.divf %90, %91 : vector<8x96xf32>
    %93 = vector.extract_strided_slice %92 {offsets = [0, 0], sizes = [8, 32], strides = [1, 1]} : vector<8x96xf32> to vector<8x32xf32>
    %94 = vector.extract_strided_slice %92 {offsets = [0, 32], sizes = [8, 32], strides = [1, 1]} : vector<8x96xf32> to vector<8x32xf32>
    %95 = vector.extract_strided_slice %92 {offsets = [0, 64], sizes = [8, 32], strides = [1, 1]} : vector<8x96xf32> to vector<8x32xf32>
    %96 = vector.extract_strided_slice %86 {offsets = [0, 96], sizes = [8, 32], strides = [1, 1]} : vector<8x128xf32> to vector<8x32xf32>
    %97 = math.tanh %96 : vector<8x32xf32>
    %98 = arith.mulf %94, %76 : vector<8x32xf32>
    %99 = arith.mulf %93, %97 : vector<8x32xf32>
    %100 = arith.addf %98, %99 : vector<8x32xf32>
    %101 = math.tanh %100 : vector<8x32xf32>
    %102 = arith.mulf %95, %101 : vector<8x32xf32>
    %103 = arith.index_cast %82 : i32 to index
    %c0_28 = arith.constant 0 : index
    %104 = vector.load %arg11[%103, %c0_28] : memref<64x32xf32, #tpu.memory_space<vmem>>, vector<8x32xf32>
    tpu.vector_store %arg11[%103, %c0_28], %102 {strides = array<i32>} : memref<64x32xf32, #tpu.memory_space<vmem>>, vector<8x32xf32>,
    %c4_i32 = arith.constant 4 : i32
    %c8_i32_29 = arith.constant 8 : i32
    %105 = arith.muli %c4_i32, %c8_i32_29 : i32
    %106 = tpu.assume_multiple %105, 8 : i32
    %107 = arith.index_cast %106 : i32 to index
    %c0_30 = arith.constant 0 : index
    %108 = vector.load %arg10[%107, %c0_30] : memref<64x128xf32, #tpu.memory_space<vmem>>, vector<8x128xf32>
    %cst_31 = arith.constant dense<0.000000e+00> : vector<8x128xf32>
    %109 = tpu.matmul %102, %7, %cst_31 {dimension_numbers = #tpu.dot_dimension_numbers<[1], [0], [0], [1], [0, 0, 1, 1], [], []>} : vector<8x32xf32>, vector<32x128xf32>, vector<8x128xf32> -> vector<8x128xf32>
    %110 = arith.addf %108, %109 : vector<8x128xf32>
    %111 = vector.extract_strided_slice %110 {offsets = [0, 0], sizes = [8, 96], strides = [1, 1]} : vector<8x128xf32> to vector<8x96xf32>
    %112 = arith.negf %111 : vector<8x96xf32>
    %113 = math.exp %112 : vector<8x96xf32>
    %cst_32 = arith.constant 1.000000e+00 : f32
    %114 = vector.broadcast %cst_32 : f32 to vector<8x96xf32>
    %115 = arith.addf %114, %113 : vector<8x96xf32>
    %116 = arith.divf %114, %115 : vector<8x96xf32>
    %117 = vector.extract_strided_slice %116 {offsets = [0, 0], sizes = [8, 32], strides = [1, 1]} : vector<8x96xf32> to vector<8x32xf32>
    %118 = vector.extract_strided_slice %116 {offsets = [0, 32], sizes = [8, 32], strides = [1, 1]} : vector<8x96xf32> to vector<8x32xf32>
    %119 = vector.extract_strided_slice %116 {offsets = [0, 64], sizes = [8, 32], strides = [1, 1]} : vector<8x96xf32> to vector<8x32xf32>
    %120 = vector.extract_strided_slice %110 {offsets = [0, 96], sizes = [8, 32], strides = [1, 1]} : vector<8x128xf32> to vector<8x32xf32>
    %121 = math.tanh %120 : vector<8x32xf32>
    %122 = arith.mulf %118, %100 : vector<8x32xf32>
    %123 = arith.mulf %117, %121 : vector<8x32xf32>
    %124 = arith.addf %122, %123 : vector<8x32xf32>
    %125 = math.tanh %124 : vector<8x32xf32>
    %126 = arith.mulf %119, %125 : vector<8x32xf32>
    %127 = arith.index_cast %106 : i32 to index
    %c0_33 = arith.constant 0 : index
    %128 = vector.load %arg11[%127, %c0_33] : memref<64x32xf32, #tpu.memory_space<vmem>>, vector<8x32xf32>
    tpu.vector_store %arg11[%127, %c0_33], %126 {strides = array<i32>} : memref<64x32xf32, #tpu.memory_space<vmem>>, vector<8x32xf32>,
    %c5_i32 = arith.constant 5 : i32
    %c8_i32_34 = arith.constant 8 : i32
    %129 = arith.muli %c5_i32, %c8_i32_34 : i32
    %130 = tpu.assume_multiple %129, 8 : i32
    %131 = arith.index_cast %130 : i32 to index
    %c0_35 = arith.constant 0 : index
    %132 = vector.load %arg10[%131, %c0_35] : memref<64x128xf32, #tpu.memory_space<vmem>>, vector<8x128xf32>
    %cst_36 = arith.constant dense<0.000000e+00> : vector<8x128xf32>
    %133 = tpu.matmul %126, %7, %cst_36 {dimension_numbers = #tpu.dot_dimension_numbers<[1], [0], [0], [1], [0, 0, 1, 1], [], []>} : vector<8x32xf32>, vector<32x128xf32>, vector<8x128xf32> -> vector<8x128xf32>
    %134 = arith.addf %132, %133 : vector<8x128xf32>
    %135 = vector.extract_strided_slice %134 {offsets = [0, 0], sizes = [8, 96], strides = [1, 1]} : vector<8x128xf32> to vector<8x96xf32>
    %136 = arith.negf %135 : vector<8x96xf32>
    %137 = math.exp %136 : vector<8x96xf32>
    %cst_37 = arith.constant 1.000000e+00 : f32
    %138 = vector.broadcast %cst_37 : f32 to vector<8x96xf32>
    %139 = arith.addf %138, %137 : vector<8x96xf32>
    %140 = arith.divf %138, %139 : vector<8x96xf32>
    %141 = vector.extract_strided_slice %140 {offsets = [0, 0], sizes = [8, 32], strides = [1, 1]} : vector<8x96xf32> to vector<8x32xf32>
    %142 = vector.extract_strided_slice %140 {offsets = [0, 32], sizes = [8, 32], strides = [1, 1]} : vector<8x96xf32> to vector<8x32xf32>
    %143 = vector.extract_strided_slice %140 {offsets = [0, 64], sizes = [8, 32], strides = [1, 1]} : vector<8x96xf32> to vector<8x32xf32>
    %144 = vector.extract_strided_slice %134 {offsets = [0, 96], sizes = [8, 32], strides = [1, 1]} : vector<8x128xf32> to vector<8x32xf32>
    %145 = math.tanh %144 : vector<8x32xf32>
    %146 = arith.mulf %142, %124 : vector<8x32xf32>
    %147 = arith.mulf %141, %145 : vector<8x32xf32>
    %148 = arith.addf %146, %147 : vector<8x32xf32>
    %149 = math.tanh %148 : vector<8x32xf32>
    %150 = arith.mulf %143, %149 : vector<8x32xf32>
    %151 = arith.index_cast %130 : i32 to index
    %c0_38 = arith.constant 0 : index
    %152 = vector.load %arg11[%151, %c0_38] : memref<64x32xf32, #tpu.memory_space<vmem>>, vector<8x32xf32>
    tpu.vector_store %arg11[%151, %c0_38], %150 {strides = array<i32>} : memref<64x32xf32, #tpu.memory_space<vmem>>, vector<8x32xf32>,
    %c6_i32 = arith.constant 6 : i32
    %c8_i32_39 = arith.constant 8 : i32
    %153 = arith.muli %c6_i32, %c8_i32_39 : i32
    %154 = tpu.assume_multiple %153, 8 : i32
    %155 = arith.index_cast %154 : i32 to index
    %c0_40 = arith.constant 0 : index
    %156 = vector.load %arg10[%155, %c0_40] : memref<64x128xf32, #tpu.memory_space<vmem>>, vector<8x128xf32>
    %cst_41 = arith.constant dense<0.000000e+00> : vector<8x128xf32>
    %157 = tpu.matmul %150, %7, %cst_41 {dimension_numbers = #tpu.dot_dimension_numbers<[1], [0], [0], [1], [0, 0, 1, 1], [], []>} : vector<8x32xf32>, vector<32x128xf32>, vector<8x128xf32> -> vector<8x128xf32>
    %158 = arith.addf %156, %157 : vector<8x128xf32>
    %159 = vector.extract_strided_slice %158 {offsets = [0, 0], sizes = [8, 96], strides = [1, 1]} : vector<8x128xf32> to vector<8x96xf32>
    %160 = arith.negf %159 : vector<8x96xf32>
    %161 = math.exp %160 : vector<8x96xf32>
    %cst_42 = arith.constant 1.000000e+00 : f32
    %162 = vector.broadcast %cst_42 : f32 to vector<8x96xf32>
    %163 = arith.addf %162, %161 : vector<8x96xf32>
    %164 = arith.divf %162, %163 : vector<8x96xf32>
    %165 = vector.extract_strided_slice %164 {offsets = [0, 0], sizes = [8, 32], strides = [1, 1]} : vector<8x96xf32> to vector<8x32xf32>
    %166 = vector.extract_strided_slice %164 {offsets = [0, 32], sizes = [8, 32], strides = [1, 1]} : vector<8x96xf32> to vector<8x32xf32>
    %167 = vector.extract_strided_slice %164 {offsets = [0, 64], sizes = [8, 32], strides = [1, 1]} : vector<8x96xf32> to vector<8x32xf32>
    %168 = vector.extract_strided_slice %158 {offsets = [0, 96], sizes = [8, 32], strides = [1, 1]} : vector<8x128xf32> to vector<8x32xf32>
    %169 = math.tanh %168 : vector<8x32xf32>
    %170 = arith.mulf %166, %148 : vector<8x32xf32>
    %171 = arith.mulf %165, %169 : vector<8x32xf32>
    %172 = arith.addf %170, %171 : vector<8x32xf32>
    %173 = math.tanh %172 : vector<8x32xf32>
    %174 = arith.mulf %167, %173 : vector<8x32xf32>
    %175 = arith.index_cast %154 : i32 to index
    %c0_43 = arith.constant 0 : index
    %176 = vector.load %arg11[%175, %c0_43] : memref<64x32xf32, #tpu.memory_space<vmem>>, vector<8x32xf32>
    tpu.vector_store %arg11[%175, %c0_43], %174 {strides = array<i32>} : memref<64x32xf32, #tpu.memory_space<vmem>>, vector<8x32xf32>,
    %c7_i32 = arith.constant 7 : i32
    %c8_i32_44 = arith.constant 8 : i32
    %177 = arith.muli %c7_i32, %c8_i32_44 : i32
    %178 = tpu.assume_multiple %177, 8 : i32
    %179 = arith.index_cast %178 : i32 to index
    %c0_45 = arith.constant 0 : index
    %180 = vector.load %arg10[%179, %c0_45] : memref<64x128xf32, #tpu.memory_space<vmem>>, vector<8x128xf32>
    %cst_46 = arith.constant dense<0.000000e+00> : vector<8x128xf32>
    %181 = tpu.matmul %174, %7, %cst_46 {dimension_numbers = #tpu.dot_dimension_numbers<[1], [0], [0], [1], [0, 0, 1, 1], [], []>} : vector<8x32xf32>, vector<32x128xf32>, vector<8x128xf32> -> vector<8x128xf32>
    %182 = arith.addf %180, %181 : vector<8x128xf32>
    %183 = vector.extract_strided_slice %182 {offsets = [0, 0], sizes = [8, 96], strides = [1, 1]} : vector<8x128xf32> to vector<8x96xf32>
    %184 = arith.negf %183 : vector<8x96xf32>
    %185 = math.exp %184 : vector<8x96xf32>
    %cst_47 = arith.constant 1.000000e+00 : f32
    %186 = vector.broadcast %cst_47 : f32 to vector<8x96xf32>
    %187 = arith.addf %186, %185 : vector<8x96xf32>
    %188 = arith.divf %186, %187 : vector<8x96xf32>
    %189 = vector.extract_strided_slice %188 {offsets = [0, 0], sizes = [8, 32], strides = [1, 1]} : vector<8x96xf32> to vector<8x32xf32>
    %190 = vector.extract_strided_slice %188 {offsets = [0, 32], sizes = [8, 32], strides = [1, 1]} : vector<8x96xf32> to vector<8x32xf32>
    %191 = vector.extract_strided_slice %188 {offsets = [0, 64], sizes = [8, 32], strides = [1, 1]} : vector<8x96xf32> to vector<8x32xf32>
    %192 = vector.extract_strided_slice %182 {offsets = [0, 96], sizes = [8, 32], strides = [1, 1]} : vector<8x128xf32> to vector<8x32xf32>
    %193 = math.tanh %192 : vector<8x32xf32>
    %194 = arith.mulf %190, %172 : vector<8x32xf32>
    %195 = arith.mulf %189, %193 : vector<8x32xf32>
    %196 = arith.addf %194, %195 : vector<8x32xf32>
    %197 = math.tanh %196 : vector<8x32xf32>
    %198 = arith.mulf %191, %197 : vector<8x32xf32>
    %199 = arith.index_cast %178 : i32 to index
    %c0_48 = arith.constant 0 : index
    %200 = vector.load %arg11[%199, %c0_48] : memref<64x32xf32, #tpu.memory_space<vmem>>, vector<8x32xf32>
    tpu.vector_store %arg11[%199, %c0_48], %198 {strides = array<i32>} : memref<64x32xf32, #tpu.memory_space<vmem>>, vector<8x32xf32>,
    %c8_i32_49 = arith.constant 8 : i32
    %c0_50 = arith.constant 0 : index
    %c0_51 = arith.constant 0 : index
    %201 = vector.load %arg4[%c0_50, %c0_51] : memref<32x128xf32, #tpu.memory_space<vmem>>, vector<32x128xf32>
    %c0_52 = arith.constant 0 : index
    %c0_53 = arith.constant 0 : index
    %202 = vector.load %arg6[%c0_52, %c0_53] : memref<1x128xf32, #tpu.memory_space<vmem>>, vector<1x128xf32>
    %c0_54 = arith.constant 0 : index
    %c0_55 = arith.constant 0 : index
    %203 = vector.load %arg11[%c0_54, %c0_55] : memref<64x32xf32, #tpu.memory_space<vmem>>, vector<64x32xf32>
    %cst_56 = arith.constant dense<0.000000e+00> : vector<64x128xf32>
    %204 = tpu.matmul %203, %201, %cst_56 {dimension_numbers = #tpu.dot_dimension_numbers<[1], [0], [0], [1], [0, 0, 1, 1], [], []>} : vector<64x32xf32>, vector<32x128xf32>, vector<64x128xf32> -> vector<64x128xf32>
    %205 = vector.broadcast %202 : vector<1x128xf32> to vector<64x128xf32>
    %206 = arith.addf %204, %205 : vector<64x128xf32>
    %c0_57 = arith.constant 0 : index
    %c0_58 = arith.constant 0 : index
    %207 = vector.load %arg10[%c0_57, %c0_58] : memref<64x128xf32, #tpu.memory_space<vmem>>, vector<64x128xf32>
    tpu.vector_store %arg10[%c0_57, %c0_58], %206 {strides = array<i32>} : memref<64x128xf32, #tpu.memory_space<vmem>>, vector<64x128xf32>,
    %c0_59 = arith.constant 0 : index
    %c0_60 = arith.constant 0 : index
    %208 = vector.load %arg5[%c0_59, %c0_60] : memref<32x128xf32, #tpu.memory_space<vmem>>, vector<32x128xf32>
    %cst_61 = arith.constant 0.000000e+00 : f32
    %209 = vector.broadcast %cst_61 : f32 to vector<8x32xf32>
    %c0_i32_62 = arith.constant 0 : i32
    %c8_i32_63 = arith.constant 8 : i32
    %210 = arith.muli %c0_i32_62, %c8_i32_63 : i32
    %211 = tpu.assume_multiple %210, 8 : i32
    %212 = arith.index_cast %211 : i32 to index
    %c0_64 = arith.constant 0 : index
    %213 = vector.load %arg10[%212, %c0_64] : memref<64x128xf32, #tpu.memory_space<vmem>>, vector<8x128xf32>
    %cst_65 = arith.constant dense<0.000000e+00> : vector<8x128xf32>
    %214 = tpu.matmul %209, %208, %cst_65 {dimension_numbers = #tpu.dot_dimension_numbers<[1], [0], [0], [1], [0, 0, 1, 1], [], []>} : vector<8x32xf32>, vector<32x128xf32>, vector<8x128xf32> -> vector<8x128xf32>
    %215 = arith.addf %213, %214 : vector<8x128xf32>
    %216 = vector.extract_strided_slice %215 {offsets = [0, 0], sizes = [8, 96], strides = [1, 1]} : vector<8x128xf32> to vector<8x96xf32>
    %217 = arith.negf %216 : vector<8x96xf32>
    %218 = math.exp %217 : vector<8x96xf32>
    %cst_66 = arith.constant 1.000000e+00 : f32
    %219 = vector.broadcast %cst_66 : f32 to vector<8x96xf32>
    %220 = arith.addf %219, %218 : vector<8x96xf32>
    %221 = arith.divf %219, %220 : vector<8x96xf32>
    %222 = vector.extract_strided_slice %221 {offsets = [0, 0], sizes = [8, 32], strides = [1, 1]} : vector<8x96xf32> to vector<8x32xf32>
    %223 = vector.extract_strided_slice %221 {offsets = [0, 32], sizes = [8, 32], strides = [1, 1]} : vector<8x96xf32> to vector<8x32xf32>
    %224 = vector.extract_strided_slice %221 {offsets = [0, 64], sizes = [8, 32], strides = [1, 1]} : vector<8x96xf32> to vector<8x32xf32>
    %225 = vector.extract_strided_slice %215 {offsets = [0, 96], sizes = [8, 32], strides = [1, 1]} : vector<8x128xf32> to vector<8x32xf32>
    %226 = math.tanh %225 : vector<8x32xf32>
    %227 = arith.mulf %223, %209 : vector<8x32xf32>
    %228 = arith.mulf %222, %226 : vector<8x32xf32>
    %229 = arith.addf %227, %228 : vector<8x32xf32>
    %230 = math.tanh %229 : vector<8x32xf32>
    %231 = arith.mulf %224, %230 : vector<8x32xf32>
    %c1_i32_67 = arith.constant 1 : i32
    %c8_i32_68 = arith.constant 8 : i32
    %232 = arith.muli %c1_i32_67, %c8_i32_68 : i32
    %233 = tpu.assume_multiple %232, 8 : i32
    %234 = arith.index_cast %233 : i32 to index
    %c0_69 = arith.constant 0 : index
    %235 = vector.load %arg10[%234, %c0_69] : memref<64x128xf32, #tpu.memory_space<vmem>>, vector<8x128xf32>
    %cst_70 = arith.constant dense<0.000000e+00> : vector<8x128xf32>
    %236 = tpu.matmul %231, %208, %cst_70 {dimension_numbers = #tpu.dot_dimension_numbers<[1], [0], [0], [1], [0, 0, 1, 1], [], []>} : vector<8x32xf32>, vector<32x128xf32>, vector<8x128xf32> -> vector<8x128xf32>
    %237 = arith.addf %235, %236 : vector<8x128xf32>
    %238 = vector.extract_strided_slice %237 {offsets = [0, 0], sizes = [8, 96], strides = [1, 1]} : vector<8x128xf32> to vector<8x96xf32>
    %239 = arith.negf %238 : vector<8x96xf32>
    %240 = math.exp %239 : vector<8x96xf32>
    %cst_71 = arith.constant 1.000000e+00 : f32
    %241 = vector.broadcast %cst_71 : f32 to vector<8x96xf32>
    %242 = arith.addf %241, %240 : vector<8x96xf32>
    %243 = arith.divf %241, %242 : vector<8x96xf32>
    %244 = vector.extract_strided_slice %243 {offsets = [0, 0], sizes = [8, 32], strides = [1, 1]} : vector<8x96xf32> to vector<8x32xf32>
    %245 = vector.extract_strided_slice %243 {offsets = [0, 32], sizes = [8, 32], strides = [1, 1]} : vector<8x96xf32> to vector<8x32xf32>
    %246 = vector.extract_strided_slice %243 {offsets = [0, 64], sizes = [8, 32], strides = [1, 1]} : vector<8x96xf32> to vector<8x32xf32>
    %247 = vector.extract_strided_slice %237 {offsets = [0, 96], sizes = [8, 32], strides = [1, 1]} : vector<8x128xf32> to vector<8x32xf32>
    %248 = math.tanh %247 : vector<8x32xf32>
    %249 = arith.mulf %245, %229 : vector<8x32xf32>
    %250 = arith.mulf %244, %248 : vector<8x32xf32>
    %251 = arith.addf %249, %250 : vector<8x32xf32>
    %252 = math.tanh %251 : vector<8x32xf32>
    %253 = arith.mulf %246, %252 : vector<8x32xf32>
    %c2_i32_72 = arith.constant 2 : i32
    %c8_i32_73 = arith.constant 8 : i32
    %254 = arith.muli %c2_i32_72, %c8_i32_73 : i32
    %255 = tpu.assume_multiple %254, 8 : i32
    %256 = arith.index_cast %255 : i32 to index
    %c0_74 = arith.constant 0 : index
    %257 = vector.load %arg10[%256, %c0_74] : memref<64x128xf32, #tpu.memory_space<vmem>>, vector<8x128xf32>
    %cst_75 = arith.constant dense<0.000000e+00> : vector<8x128xf32>
    %258 = tpu.matmul %253, %208, %cst_75 {dimension_numbers = #tpu.dot_dimension_numbers<[1], [0], [0], [1], [0, 0, 1, 1], [], []>} : vector<8x32xf32>, vector<32x128xf32>, vector<8x128xf32> -> vector<8x128xf32>
    %259 = arith.addf %257, %258 : vector<8x128xf32>
    %260 = vector.extract_strided_slice %259 {offsets = [0, 0], sizes = [8, 96], strides = [1, 1]} : vector<8x128xf32> to vector<8x96xf32>
    %261 = arith.negf %260 : vector<8x96xf32>
    %262 = math.exp %261 : vector<8x96xf32>
    %cst_76 = arith.constant 1.000000e+00 : f32
    %263 = vector.broadcast %cst_76 : f32 to vector<8x96xf32>
    %264 = arith.addf %263, %262 : vector<8x96xf32>
    %265 = arith.divf %263, %264 : vector<8x96xf32>
    %266 = vector.extract_strided_slice %265 {offsets = [0, 0], sizes = [8, 32], strides = [1, 1]} : vector<8x96xf32> to vector<8x32xf32>
    %267 = vector.extract_strided_slice %265 {offsets = [0, 32], sizes = [8, 32], strides = [1, 1]} : vector<8x96xf32> to vector<8x32xf32>
    %268 = vector.extract_strided_slice %265 {offsets = [0, 64], sizes = [8, 32], strides = [1, 1]} : vector<8x96xf32> to vector<8x32xf32>
    %269 = vector.extract_strided_slice %259 {offsets = [0, 96], sizes = [8, 32], strides = [1, 1]} : vector<8x128xf32> to vector<8x32xf32>
    %270 = math.tanh %269 : vector<8x32xf32>
    %271 = arith.mulf %267, %251 : vector<8x32xf32>
    %272 = arith.mulf %266, %270 : vector<8x32xf32>
    %273 = arith.addf %271, %272 : vector<8x32xf32>
    %274 = math.tanh %273 : vector<8x32xf32>
    %275 = arith.mulf %268, %274 : vector<8x32xf32>
    %c3_i32_77 = arith.constant 3 : i32
    %c8_i32_78 = arith.constant 8 : i32
    %276 = arith.muli %c3_i32_77, %c8_i32_78 : i32
    %277 = tpu.assume_multiple %276, 8 : i32
    %278 = arith.index_cast %277 : i32 to index
    %c0_79 = arith.constant 0 : index
    %279 = vector.load %arg10[%278, %c0_79] : memref<64x128xf32, #tpu.memory_space<vmem>>, vector<8x128xf32>
    %cst_80 = arith.constant dense<0.000000e+00> : vector<8x128xf32>
    %280 = tpu.matmul %275, %208, %cst_80 {dimension_numbers = #tpu.dot_dimension_numbers<[1], [0], [0], [1], [0, 0, 1, 1], [], []>} : vector<8x32xf32>, vector<32x128xf32>, vector<8x128xf32> -> vector<8x128xf32>
    %281 = arith.addf %279, %280 : vector<8x128xf32>
    %282 = vector.extract_strided_slice %281 {offsets = [0, 0], sizes = [8, 96], strides = [1, 1]} : vector<8x128xf32> to vector<8x96xf32>
    %283 = arith.negf %282 : vector<8x96xf32>
    %284 = math.exp %283 : vector<8x96xf32>
    %cst_81 = arith.constant 1.000000e+00 : f32
    %285 = vector.broadcast %cst_81 : f32 to vector<8x96xf32>
    %286 = arith.addf %285, %284 : vector<8x96xf32>
    %287 = arith.divf %285, %286 : vector<8x96xf32>
    %288 = vector.extract_strided_slice %287 {offsets = [0, 0], sizes = [8, 32], strides = [1, 1]} : vector<8x96xf32> to vector<8x32xf32>
    %289 = vector.extract_strided_slice %287 {offsets = [0, 32], sizes = [8, 32], strides = [1, 1]} : vector<8x96xf32> to vector<8x32xf32>
    %290 = vector.extract_strided_slice %287 {offsets = [0, 64], sizes = [8, 32], strides = [1, 1]} : vector<8x96xf32> to vector<8x32xf32>
    %291 = vector.extract_strided_slice %281 {offsets = [0, 96], sizes = [8, 32], strides = [1, 1]} : vector<8x128xf32> to vector<8x32xf32>
    %292 = math.tanh %291 : vector<8x32xf32>
    %293 = arith.mulf %289, %273 : vector<8x32xf32>
    %294 = arith.mulf %288, %292 : vector<8x32xf32>
    %295 = arith.addf %293, %294 : vector<8x32xf32>
    %296 = math.tanh %295 : vector<8x32xf32>
    %297 = arith.mulf %290, %296 : vector<8x32xf32>
    %c4_i32_82 = arith.constant 4 : i32
    %c8_i32_83 = arith.constant 8 : i32
    %298 = arith.muli %c4_i32_82, %c8_i32_83 : i32
    %299 = tpu.assume_multiple %298, 8 : i32
    %300 = arith.index_cast %299 : i32 to index
    %c0_84 = arith.constant 0 : index
    %301 = vector.load %arg10[%300, %c0_84] : memref<64x128xf32, #tpu.memory_space<vmem>>, vector<8x128xf32>
    %cst_85 = arith.constant dense<0.000000e+00> : vector<8x128xf32>
    %302 = tpu.matmul %297, %208, %cst_85 {dimension_numbers = #tpu.dot_dimension_numbers<[1], [0], [0], [1], [0, 0, 1, 1], [], []>} : vector<8x32xf32>, vector<32x128xf32>, vector<8x128xf32> -> vector<8x128xf32>
    %303 = arith.addf %301, %302 : vector<8x128xf32>
    %304 = vector.extract_strided_slice %303 {offsets = [0, 0], sizes = [8, 96], strides = [1, 1]} : vector<8x128xf32> to vector<8x96xf32>
    %305 = arith.negf %304 : vector<8x96xf32>
    %306 = math.exp %305 : vector<8x96xf32>
    %cst_86 = arith.constant 1.000000e+00 : f32
    %307 = vector.broadcast %cst_86 : f32 to vector<8x96xf32>
    %308 = arith.addf %307, %306 : vector<8x96xf32>
    %309 = arith.divf %307, %308 : vector<8x96xf32>
    %310 = vector.extract_strided_slice %309 {offsets = [0, 0], sizes = [8, 32], strides = [1, 1]} : vector<8x96xf32> to vector<8x32xf32>
    %311 = vector.extract_strided_slice %309 {offsets = [0, 32], sizes = [8, 32], strides = [1, 1]} : vector<8x96xf32> to vector<8x32xf32>
    %312 = vector.extract_strided_slice %309 {offsets = [0, 64], sizes = [8, 32], strides = [1, 1]} : vector<8x96xf32> to vector<8x32xf32>
    %313 = vector.extract_strided_slice %303 {offsets = [0, 96], sizes = [8, 32], strides = [1, 1]} : vector<8x128xf32> to vector<8x32xf32>
    %314 = math.tanh %313 : vector<8x32xf32>
    %315 = arith.mulf %311, %295 : vector<8x32xf32>
    %316 = arith.mulf %310, %314 : vector<8x32xf32>
    %317 = arith.addf %315, %316 : vector<8x32xf32>
    %318 = math.tanh %317 : vector<8x32xf32>
    %319 = arith.mulf %312, %318 : vector<8x32xf32>
    %c5_i32_87 = arith.constant 5 : i32
    %c8_i32_88 = arith.constant 8 : i32
    %320 = arith.muli %c5_i32_87, %c8_i32_88 : i32
    %321 = tpu.assume_multiple %320, 8 : i32
    %322 = arith.index_cast %321 : i32 to index
    %c0_89 = arith.constant 0 : index
    %323 = vector.load %arg10[%322, %c0_89] : memref<64x128xf32, #tpu.memory_space<vmem>>, vector<8x128xf32>
    %cst_90 = arith.constant dense<0.000000e+00> : vector<8x128xf32>
    %324 = tpu.matmul %319, %208, %cst_90 {dimension_numbers = #tpu.dot_dimension_numbers<[1], [0], [0], [1], [0, 0, 1, 1], [], []>} : vector<8x32xf32>, vector<32x128xf32>, vector<8x128xf32> -> vector<8x128xf32>
    %325 = arith.addf %323, %324 : vector<8x128xf32>
    %326 = vector.extract_strided_slice %325 {offsets = [0, 0], sizes = [8, 96], strides = [1, 1]} : vector<8x128xf32> to vector<8x96xf32>
    %327 = arith.negf %326 : vector<8x96xf32>
    %328 = math.exp %327 : vector<8x96xf32>
    %cst_91 = arith.constant 1.000000e+00 : f32
    %329 = vector.broadcast %cst_91 : f32 to vector<8x96xf32>
    %330 = arith.addf %329, %328 : vector<8x96xf32>
    %331 = arith.divf %329, %330 : vector<8x96xf32>
    %332 = vector.extract_strided_slice %331 {offsets = [0, 0], sizes = [8, 32], strides = [1, 1]} : vector<8x96xf32> to vector<8x32xf32>
    %333 = vector.extract_strided_slice %331 {offsets = [0, 32], sizes = [8, 32], strides = [1, 1]} : vector<8x96xf32> to vector<8x32xf32>
    %334 = vector.extract_strided_slice %331 {offsets = [0, 64], sizes = [8, 32], strides = [1, 1]} : vector<8x96xf32> to vector<8x32xf32>
    %335 = vector.extract_strided_slice %325 {offsets = [0, 96], sizes = [8, 32], strides = [1, 1]} : vector<8x128xf32> to vector<8x32xf32>
    %336 = math.tanh %335 : vector<8x32xf32>
    %337 = arith.mulf %333, %317 : vector<8x32xf32>
    %338 = arith.mulf %332, %336 : vector<8x32xf32>
    %339 = arith.addf %337, %338 : vector<8x32xf32>
    %340 = math.tanh %339 : vector<8x32xf32>
    %341 = arith.mulf %334, %340 : vector<8x32xf32>
    %c6_i32_92 = arith.constant 6 : i32
    %c8_i32_93 = arith.constant 8 : i32
    %342 = arith.muli %c6_i32_92, %c8_i32_93 : i32
    %343 = tpu.assume_multiple %342, 8 : i32
    %344 = arith.index_cast %343 : i32 to index
    %c0_94 = arith.constant 0 : index
    %345 = vector.load %arg10[%344, %c0_94] : memref<64x128xf32, #tpu.memory_space<vmem>>, vector<8x128xf32>
    %cst_95 = arith.constant dense<0.000000e+00> : vector<8x128xf32>
    %346 = tpu.matmul %341, %208, %cst_95 {dimension_numbers = #tpu.dot_dimension_numbers<[1], [0], [0], [1], [0, 0, 1, 1], [], []>} : vector<8x32xf32>, vector<32x128xf32>, vector<8x128xf32> -> vector<8x128xf32>
    %347 = arith.addf %345, %346 : vector<8x128xf32>
    %348 = vector.extract_strided_slice %347 {offsets = [0, 0], sizes = [8, 96], strides = [1, 1]} : vector<8x128xf32> to vector<8x96xf32>
    %349 = arith.negf %348 : vector<8x96xf32>
    %350 = math.exp %349 : vector<8x96xf32>
    %cst_96 = arith.constant 1.000000e+00 : f32
    %351 = vector.broadcast %cst_96 : f32 to vector<8x96xf32>
    %352 = arith.addf %351, %350 : vector<8x96xf32>
    %353 = arith.divf %351, %352 : vector<8x96xf32>
    %354 = vector.extract_strided_slice %353 {offsets = [0, 0], sizes = [8, 32], strides = [1, 1]} : vector<8x96xf32> to vector<8x32xf32>
    %355 = vector.extract_strided_slice %353 {offsets = [0, 32], sizes = [8, 32], strides = [1, 1]} : vector<8x96xf32> to vector<8x32xf32>
    %356 = vector.extract_strided_slice %353 {offsets = [0, 64], sizes = [8, 32], strides = [1, 1]} : vector<8x96xf32> to vector<8x32xf32>
    %357 = vector.extract_strided_slice %347 {offsets = [0, 96], sizes = [8, 32], strides = [1, 1]} : vector<8x128xf32> to vector<8x32xf32>
    %358 = math.tanh %357 : vector<8x32xf32>
    %359 = arith.mulf %355, %339 : vector<8x32xf32>
    %360 = arith.mulf %354, %358 : vector<8x32xf32>
    %361 = arith.addf %359, %360 : vector<8x32xf32>
    %362 = math.tanh %361 : vector<8x32xf32>
    %363 = arith.mulf %356, %362 : vector<8x32xf32>
    %c7_i32_97 = arith.constant 7 : i32
    %c8_i32_98 = arith.constant 8 : i32
    %364 = arith.muli %c7_i32_97, %c8_i32_98 : i32
    %365 = tpu.assume_multiple %364, 8 : i32
    %366 = arith.index_cast %365 : i32 to index
    %c0_99 = arith.constant 0 : index
    %367 = vector.load %arg10[%366, %c0_99] : memref<64x128xf32, #tpu.memory_space<vmem>>, vector<8x128xf32>
    %cst_100 = arith.constant dense<0.000000e+00> : vector<8x128xf32>
    %368 = tpu.matmul %363, %208, %cst_100 {dimension_numbers = #tpu.dot_dimension_numbers<[1], [0], [0], [1], [0, 0, 1, 1], [], []>} : vector<8x32xf32>, vector<32x128xf32>, vector<8x128xf32> -> vector<8x128xf32>
    %369 = arith.addf %367, %368 : vector<8x128xf32>
    %370 = vector.extract_strided_slice %369 {offsets = [0, 0], sizes = [8, 96], strides = [1, 1]} : vector<8x128xf32> to vector<8x96xf32>
    %371 = arith.negf %370 : vector<8x96xf32>
    %372 = math.exp %371 : vector<8x96xf32>
    %cst_101 = arith.constant 1.000000e+00 : f32
    %373 = vector.broadcast %cst_101 : f32 to vector<8x96xf32>
    %374 = arith.addf %373, %372 : vector<8x96xf32>
    %375 = arith.divf %373, %374 : vector<8x96xf32>
    %376 = vector.extract_strided_slice %375 {offsets = [0, 0], sizes = [8, 32], strides = [1, 1]} : vector<8x96xf32> to vector<8x32xf32>
    %377 = vector.extract_strided_slice %375 {offsets = [0, 32], sizes = [8, 32], strides = [1, 1]} : vector<8x96xf32> to vector<8x32xf32>
    %378 = vector.extract_strided_slice %375 {offsets = [0, 64], sizes = [8, 32], strides = [1, 1]} : vector<8x96xf32> to vector<8x32xf32>
    %379 = vector.extract_strided_slice %369 {offsets = [0, 96], sizes = [8, 32], strides = [1, 1]} : vector<8x128xf32> to vector<8x32xf32>
    %380 = math.tanh %379 : vector<8x32xf32>
    %381 = arith.mulf %377, %361 : vector<8x32xf32>
    %382 = arith.mulf %376, %380 : vector<8x32xf32>
    %383 = arith.addf %381, %382 : vector<8x32xf32>
    %384 = math.tanh %383 : vector<8x32xf32>
    %385 = arith.mulf %378, %384 : vector<8x32xf32>
    %c8_i32_102 = arith.constant 8 : i32
    %c0_103 = arith.constant 0 : index
    %c0_104 = arith.constant 0 : index
    %386 = vector.load %arg7[%c0_103, %c0_104] : memref<32x128xf32, #tpu.memory_space<vmem>>, vector<32x128xf32>
    %cst_105 = arith.constant dense<0.000000e+00> : vector<8x128xf32>
    %387 = tpu.matmul %385, %386, %cst_105 {dimension_numbers = #tpu.dot_dimension_numbers<[1], [0], [0], [1], [0, 0, 1, 1], [], []>} : vector<8x32xf32>, vector<32x128xf32>, vector<8x128xf32> -> vector<8x128xf32>
    %c0_106 = arith.constant 0 : index
    %c0_107 = arith.constant 0 : index
    %388 = vector.load %arg8[%c0_106, %c0_107] : memref<1x128xf32, #tpu.memory_space<vmem>>, vector<1x128xf32>
    %389 = vector.broadcast %388 : vector<1x128xf32> to vector<8x128xf32>
    %390 = arith.addf %387, %389 : vector<8x128xf32>
    %c0_108 = arith.constant 0 : index
    %c0_109 = arith.constant 0 : index
    %391 = vector.load %arg9[%c0_108, %c0_109] : memref<8x128xf32, #tpu.memory_space<vmem>>, vector<8x128xf32>
    tpu.vector_store %arg9[%c0_108, %c0_109], %390 {strides = array<i32>} : memref<8x128xf32, #tpu.memory_space<vmem>>, vector<8x128xf32>,
    return
  }
}

</mosaic_0001>

<llo_original>
// kernel: lstm_model_forward.1
$region0: #{lstm_model_forward.1}
  #allocation0 [shape = 'u32[]', space=smem, size = 0x4, offset = 0x4, fixed_abs, tag = 'smem constant byte address 0x4 - core index']
  #allocation1 [shape = 'u32[144,128]{1,0:T(1,128)}', space=vmem, size = 0x12000, scoped, tag = 'internal scratch']
  #allocation2 [shape = 'f32[64,128]{1,0:T(8,128)}', space=vmem, size = 0x8000, scoped, tag = 'scratch operand']
  #allocation3 [shape = 'f32[64,32]{1,0:T(8,128)}', space=vmem, size = 0x8000, scoped, tag = 'scratch operand']
  %s0 = inlined_call_operand.vmem [shape: f32[64,128], index: 0, kind: input, shape index: {}]
  %s1 = inlined_call_operand.hbm [shape: f32[128,128], index: 1, kind: input, shape index: {}]
  %s2 = inlined_call_operand.vmem [shape: f32[32,128], index: 2, kind: input, shape index: {}]
  %s3 = inlined_call_operand.hbm [shape: f32[1,128], index: 3, kind: input, shape index: {}]
  %s4 = inlined_call_operand.vmem [shape: f32[32,128], index: 4, kind: input, shape index: {}]
  %s5 = inlined_call_operand.vmem [shape: f32[32,128], index: 5, kind: input, shape index: {}]
  %s6 = inlined_call_operand.hbm [shape: f32[1,128], index: 6, kind: input, shape index: {}]
  %s7 = inlined_call_operand.vmem [shape: f32[32,128], index: 7, kind: input, shape index: {}]
  %s8 = inlined_call_operand.hbm [shape: f32[1,128], index: 8, kind: input, shape index: {}]
  %s9 = inlined_call_operand.vmem [shape: f32[8,128], index: 9, kind: output, shape index: {}]
  %s10 = sld [smem:[#allocation0]]
  $region62: #{lstm_model_forward.1} parent=0
    _
  %s12 = ssub.s32 1, %s10
  %s13 = scalar_select 0, %s12, %s10
  $region1: #{lstm_model_forward.1} parent=0
    #allocation4 [shape = 'u8[65536]{0}', space=vmem, size = 0x10000, scoped, tag = 'input window, operand 1, single buffered']
    #allocation5 [shape = 's32[1]{0}', space=sflag, size = 0x4, scoped, tag = 'scoped memory for lstm_model_forward.1']
    #allocation6 [shape = 'u8[512]{0}', space=vmem, size = 0x400, scoped, tag = 'input window, operand 3, single buffered']
    #allocation7 [shape = 's32[1]{0}', space=sflag, size = 0x4, scoped, tag = 'scoped memory for lstm_model_forward.1']
    #allocation8 [shape = 'u8[512]{0}', space=vmem, size = 0x400, scoped, tag = 'input window, operand 6, single buffered']
    #allocation9 [shape = 'u8[512]{0}', space=vmem, size = 0x400, scoped, tag = 'input window, operand 8, single buffered']
    #allocation10 [shape = 's32[1]{0}', space=sflag, size = 0x4, scoped, tag = 'scoped memory for lstm_model_forward.1']
    %14 = vsyncpa [#allocation5], 0
    %15 = vsyncpa [#allocation7], 0
    %16 = vsyncpa [#allocation10], 0
    // Predicated region
    $region2: #{lstm_model_forward.1} parent=1 // pred_check
      _
    $region3: #{lstm_model_forward.1} parent=1 // pred_check_branch
      %18 = sbr.rel (0) target = $region5
    $region4: #{lstm_model_forward.1} parent=1 // pred_region
      _
    $region5: #{lstm_model_forward.1} parent=1 // pred_fallthru
      _
    // Predicated region
    $region6: #{lstm_model_forward.1} parent=1 // pred_check
      _
    $region7: #{lstm_model_forward.1} parent=1 // pred_check_branch
      %20 = sbr.rel (0) target = $region9
    $region8: #{lstm_model_forward.1} parent=1 // pred_region
      %s22 = ssub.s32 2048, 2048
      %23 = vsyncadd [#allocation5], %s22
      %s24 = sshll.u32 [#allocation4], 4
      %s25 = int_to_ptr.vmem [resolvable:$true] %s24
      %30 = dma.hbm_to_vmem [thread:$0]  %s1, 2048, %s25, [#allocation5], 128, 128, 8
    $region9: #{lstm_model_forward.1} parent=1 // pred_fallthru
      _
    // Predicated region
    $region10: #{lstm_model_forward.1} parent=1 // pred_check
      _
    $region11: #{lstm_model_forward.1} parent=1 // pred_check_branch
      %32 = sbr.rel (0) target = $region13
    $region12: #{lstm_model_forward.1} parent=1 // pred_region
      _
    $region13: #{lstm_model_forward.1} parent=1 // pred_fallthru
      _
    // Predicated region
    $region14: #{lstm_model_forward.1} parent=1 // pred_check
      _
    $region15: #{lstm_model_forward.1} parent=1 // pred_check_branch
      %34 = sbr.rel (0) target = $region17
    $region16: #{lstm_model_forward.1} parent=1 // pred_region
      %s36 = ssub.s32 16, 16
      %37 = vsyncadd [#allocation7], %s36
      %s39 = sshll.u32 [#allocation6], 4
      %s40 = int_to_ptr.vmem [resolvable:$true] %s39
      %42 = dma.hbm_to_vmem [thread:$0]  %s3, 16, %s40, [#allocation7]
    $region17: #{lstm_model_forward.1} parent=1 // pred_fallthru
      _
    // Predicated region
    $region18: #{lstm_model_forward.1} parent=1 // pred_check
      _
    $region19: #{lstm_model_forward.1} parent=1 // pred_check_branch
      %44 = sbr.rel (0) target = $region21
    $region20: #{lstm_model_forward.1} parent=1 // pred_region
      _
    $region21: #{lstm_model_forward.1} parent=1 // pred_fallthru
      _
    // Predicated region
    $region22: #{lstm_model_forward.1} parent=1 // pred_check
      _
    $region23: #{lstm_model_forward.1} parent=1 // pred_check_branch
      %46 = sbr.rel (0) target = $region25
    $region24: #{lstm_model_forward.1} parent=1 // pred_region
      _
    $region25: #{lstm_model_forward.1} parent=1 // pred_fallthru
      _
    // Predicated region
    $region26: #{lstm_model_forward.1} parent=1 // pred_check
      _
    $region27: #{lstm_model_forward.1} parent=1 // pred_check_branch
      %48 = sbr.rel (0) target = $region29
    $region28: #{lstm_model_forward.1} parent=1 // pred_region
      %s50 = ssub.s32 16, 16
      %51 = vsyncadd [#allocation7], %s50
      %s53 = sshll.u32 [#allocation8], 4
      %s54 = int_to_ptr.vmem [resolvable:$true] %s53
      %56 = dma.hbm_to_vmem [thread:$0]  %s6, 16, %s54, [#allocation7]
    $region29: #{lstm_model_forward.1} parent=1 // pred_fallthru
      _
    // Predicated region
    $region30: #{lstm_model_forward.1} parent=1 // pred_check
      _
    $region31: #{lstm_model_forward.1} parent=1 // pred_check_branch
      %58 = sbr.rel (0) target = $region33
    $region32: #{lstm_model_forward.1} parent=1 // pred_region
      _
    $region33: #{lstm_model_forward.1} parent=1 // pred_fallthru
      _
    // Predicated region
    $region34: #{lstm_model_forward.1} parent=1 // pred_check
      _
    $region35: #{lstm_model_forward.1} parent=1 // pred_check_branch
      %60 = sbr.rel (0) target = $region37
    $region36: #{lstm_model_forward.1} parent=1 // pred_region
      %s62 = ssub.s32 16, 16
      %63 = vsyncadd [#allocation10], %s62
      %s65 = sshll.u32 [#allocation9], 4
      %s66 = int_to_ptr.vmem [resolvable:$true] %s65
      %68 = dma.hbm_to_vmem [thread:$0]  %s8, 16, %s66, [#allocation10]
    $region37: #{lstm_model_forward.1} parent=1 // pred_fallthru
      _
    // Predicated region
    $region38: #{lstm_model_forward.1} parent=1 // pred_check
      _
    $region39: #{lstm_model_forward.1} parent=1 // pred_check_branch
      %70 = sbr.rel (0) target = $region41
    $region40: #{lstm_model_forward.1} parent=1 // pred_region
      %71 = dma.done [#allocation5], 2048
    $region41: #{lstm_model_forward.1} parent=1 // pred_fallthru
      _
    // Predicated region
    $region42: #{lstm_model_forward.1} parent=1 // pred_check
      _
    $region43: #{lstm_model_forward.1} parent=1 // pred_check_branch
      %73 = sbr.rel (0) target = $region45
    $region44: #{lstm_model_forward.1} parent=1 // pred_region
      %74 = dma.done [#allocation7], 16
    $region45: #{lstm_model_forward.1} parent=1 // pred_fallthru
      _
    // Predicated region
    $region46: #{lstm_model_forward.1} parent=1 // pred_check
      _
    $region47: #{lstm_model_forward.1} parent=1 // pred_check_branch
      %76 = sbr.rel (0) target = $region49
    $region48: #{lstm_model_forward.1} parent=1 // pred_region
      %77 = dma.done [#allocation7], 16
    $region49: #{lstm_model_forward.1} parent=1 // pred_fallthru
      _
    // Predicated region
    $region50: #{lstm_model_forward.1} parent=1 // pred_check
      _
    $region51: #{lstm_model_forward.1} parent=1 // pred_check_branch
      %79 = sbr.rel (0) target = $region53
    $region52: #{lstm_model_forward.1} parent=1 // pred_region
      %80 = dma.done [#allocation10], 16
    $region53: #{lstm_model_forward.1} parent=1 // pred_fallthru
      _
    %v81 = vld [vmem:[#allocation4] sm:$0xff]
    %v82 = vld [vmem:[#allocation4 + $0x8] sm:$0xff]
    %v83 = vld [vmem:[#allocation4 + $0x10] sm:$0xff]
    %v84 = vld [vmem:[#allocation4 + $0x18] sm:$0xff]
    %v85 = vld [vmem:[#allocation4 + $0x20] sm:$0xff]
    %v86 = vld [vmem:[#allocation4 + $0x28] sm:$0xff]
    %v87 = vld [vmem:[#allocation4 + $0x30] sm:$0xff]
    %v88 = vld [vmem:[#allocation4 + $0x38] sm:$0xff]
    %v89 = vld [vmem:[#allocation4 + $0x40] sm:$0xff]
    %v90 = vld [vmem:[#allocation4 + $0x48] sm:$0xff]
    %v91 = vld [vmem:[#allocation4 + $0x50] sm:$0xff]
    %v92 = vld [vmem:[#allocation4 + $0x58] sm:$0xff]
    %v93 = vld [vmem:[#allocation4 + $0x60] sm:$0xff]
    %v94 = vld [vmem:[#allocation4 + $0x68] sm:$0xff]
    %v95 = vld [vmem:[#allocation4 + $0x70] sm:$0xff]
    %v96 = vld [vmem:[#allocation4 + $0x78] sm:$0xff]
    %v97 = vld [vmem:[#allocation6] sm:$0x1]
    %v98 = vld [vmem:[%s0] sm:$0xff]
    %v99 = vld [vmem:[%s0 + $0x8] sm:$0xff]
    %v100 = vld [vmem:[%s0 + $0x10] sm:$0xff]
    %v101 = vld [vmem:[%s0 + $0x18] sm:$0xff]
    %v102 = vld [vmem:[%s0 + $0x20] sm:$0xff]
    %v103 = vld [vmem:[%s0 + $0x28] sm:$0xff]
    %v104 = vld [vmem:[%s0 + $0x30] sm:$0xff]
    %v105 = vld [vmem:[%s0 + $0x38] sm:$0xff]
    %v107 = vlaneseq
    %v108 = vshrl.u32 %v107, 7
    %v109 = vsub.s32 0, %v108
    %v110 = vrot.slane %v97, %v109
    %112 = vmatprep.subr.mxu0 0.0
    %113 = vmatpush1.msra.mxu0 %v96
    %114 = vmatprep.subr.mxu0 0.0
    %115 = vmatpush1.msra.mxu0 %v95
    %116 = vmatprep.subr.mxu0 0.0
    %117 = vmatpush1.msra.mxu0 %v94
    %118 = vmatprep.subr.mxu0 0.0
    %119 = vmatpush1.msra.mxu0 %v93
    %120 = vmatprep.subr.mxu0 0.0
    %121 = vmatpush1.msra.mxu0 %v92
    %122 = vmatprep.subr.mxu0 0.0
    %123 = vmatpush1.msra.mxu0 %v91
    %124 = vmatprep.subr.mxu0 0.0
    %125 = vmatpush1.msra.mxu0 %v90
    %126 = vmatprep.subr.mxu0 0.0
    %127 = vmatpush1.msra.mxu0 %v89
    %128 = vmatprep.subr.mxu0 0.0
    %129 = vmatpush1.msra.mxu0 %v88
    %130 = vmatprep.subr.mxu0 0.0
    %131 = vmatpush1.msra.mxu0 %v87
    %132 = vmatprep.subr.mxu0 0.0
    %133 = vmatpush1.msra.mxu0 %v86
    %134 = vmatprep.subr.mxu0 0.0
    %135 = vmatpush1.msra.mxu0 %v85
    %136 = vmatprep.subr.mxu0 0.0
    %137 = vmatpush1.msra.mxu0 %v84
    %138 = vmatprep.subr.mxu0 0.0
    %139 = vmatpush1.msra.mxu0 %v83
    %140 = vmatprep.subr.mxu0 0.0
    %141 = vmatpush1.msra.mxu0 %v82
    %142 = vmatprep.subr.mxu0 0.0
    %143 = vmatpush1.msra.mxu0 %v81
    %144 = vmatprep.subr.mxu0 0.0
    %145 = vmatpush2.msra.mxu0 0.0
    %146 = vmatprep.subr.mxu0 0.0
    %147 = vmatpush2.msra.mxu0 0.0
    %148 = vmatprep.subr.mxu0 0.0
    %149 = vmatpush2.msra.mxu0 0.0
    %150 = vmatprep.subr.mxu0 0.0
    %151 = vmatpush2.msra.mxu0 0.0
    %152 = vmatprep.subr.mxu0 0.0
    %153 = vmatpush2.msra.mxu0 0.0
    %154 = vmatprep.subr.mxu0 0.0
    %155 = vmatpush2.msra.mxu0 0.0
    %156 = vmatprep.subr.mxu0 0.0
    %157 = vmatpush2.msra.mxu0 0.0
    %158 = vmatprep.subr.mxu0 0.0
    %159 = vmatpush2.msra.mxu0 0.0
    %160 = vmatprep.subr.mxu0 0.0
    %161 = vmatpush2.msra.mxu0 0.0
    %162 = vmatprep.subr.mxu0 0.0
    %163 = vmatpush2.msra.mxu0 0.0
    %164 = vmatprep.subr.mxu0 0.0
    %165 = vmatpush2.msra.mxu0 0.0
    %166 = vmatprep.subr.mxu0 0.0
    %167 = vmatpush2.msra.mxu0 0.0
    %168 = vmatprep.subr.mxu0 0.0
    %169 = vmatpush2.msra.mxu0 0.0
    %170 = vmatprep.subr.mxu0 0.0
    %171 = vmatpush2.msra.mxu0 0.0
    %172 = vmatprep.subr.mxu0 0.0
    %173 = vmatpush2.msra.mxu0 0.0
    %174 = vmatprep.subr.mxu0 0.0
    %175 = vmatpush2.msra.mxu0 0.0
    %176 = vmatprep.mubr.f32.mxu0 0.0
    %177 = vmatmul.mubr.f32.gmra.mxu0 %v98
    %v178 = vpop.f32.mrf.mxu0
    %v179 = vadd.f32 %v110, %v178
    %v180 = vpop.f32.mrf.mxu0
    %181 = vmatprep.mubr.f32.mxu0 0.0
    %182 = vmatmul.mubr.f32.gmra.mxu0 %v99
    %v183 = vpop.f32.mrf.mxu0
    %v184 = vadd.f32 %v110, %v183
    %v185 = vpop.f32.mrf.mxu0
    %186 = vmatprep.mubr.f32.mxu0 0.0
    %187 = vmatmul.mubr.f32.gmra.mxu0 %v100
    %v188 = vpop.f32.mrf.mxu0
    %v189 = vadd.f32 %v110, %v188
    %v190 = vpop.f32.mrf.mxu0
    %191 = vmatprep.mubr.f32.mxu0 0.0
    %192 = vmatmul.mubr.f32.gmra.mxu0 %v101
    %v193 = vpop.f32.mrf.mxu0
    %v194 = vadd.f32 %v110, %v193
    %v195 = vpop.f32.mrf.mxu0
    %196 = vmatprep.mubr.f32.mxu0 0.0
    %197 = vmatmul.mubr.f32.gmra.mxu0 %v102
    %v198 = vpop.f32.mrf.mxu0
    %v199 = vadd.f32 %v110, %v198
    %v200 = vpop.f32.mrf.mxu0
    %201 = vmatprep.mubr.f32.mxu0 0.0
    %202 = vmatmul.mubr.f32.gmra.mxu0 %v103
    %v203 = vpop.f32.mrf.mxu0
    %v204 = vadd.f32 %v110, %v203
    %v205 = vpop.f32.mrf.mxu0
    %206 = vmatprep.mubr.f32.mxu0 0.0
    %207 = vmatmul.mubr.f32.gmra.mxu0 %v104
    %v208 = vpop.f32.mrf.mxu0
    %v209 = vadd.f32 %v110, %v208
    %v210 = vpop.f32.mrf.mxu0
    %211 = vmatprep.mubr.f32.mxu0 0.0
    %212 = vmatmul.mubr.f32.gmra.mxu0 %v105
    %v213 = vpop.f32.mrf.mxu0
    %v214 = vadd.f32 %v110, %v213
    %v215 = vpop.f32.mrf.mxu0
    %216 = vdwg.mxu0
    %217 = vst [vmem:[#allocation2] sm:$0xff] %v179
    %218 = vst [vmem:[#allocation2 + $0x8] sm:$0xff] %v184
    %219 = vst [vmem:[#allocation2 + $0x10] sm:$0xff] %v189
    %220 = vst [vmem:[#allocation2 + $0x18] sm:$0xff] %v194
    %221 = vst [vmem:[#allocation2 + $0x20] sm:$0xff] %v199
    %222 = vst [vmem:[#allocation2 + $0x28] sm:$0xff] %v204
    %223 = vst [vmem:[#allocation2 + $0x30] sm:$0xff] %v209
    %224 = vst [vmem:[#allocation2 + $0x38] sm:$0xff] %v214
    %v225 = vld [vmem:[%s2] sm:$0xff]
    %v226 = vld [vmem:[%s2 + $0x8] sm:$0xff]
    %v227 = vld [vmem:[%s2 + $0x10] sm:$0xff]
    %v228 = vld [vmem:[%s2 + $0x18] sm:$0xff]
    %v229 = vld [vmem:[#allocation2] sm:$0xff]
    %vm230 = vcmask 261120
    %v232 = vsel %vm230, 0.0, 0
    %234 = vmatprep.subr.mxu0 0.0
    %235 = vmatpush1.msra.mxu0 0.0
    %236 = vmatprep.subr.mxu0 0.0
    %237 = vmatpush1.msra.mxu0 0.0
    %238 = vmatprep.subr.mxu0 0.0
    %239 = vmatpush1.msra.mxu0 0.0
    %240 = vmatprep.subr.mxu0 0.0
    %241 = vmatpush1.msra.mxu0 0.0
    %242 = vmatprep.subr.mxu0 0.0
    %243 = vmatpush1.msra.mxu0 0.0
    %244 = vmatprep.subr.mxu0 0.0
    %245 = vmatpush1.msra.mxu0 0.0
    %246 = vmatprep.subr.mxu0 0.0
    %247 = vmatpush1.msra.mxu0 0.0
    %248 = vmatprep.subr.mxu0 0.0
    %249 = vmatpush1.msra.mxu0 0.0
    %250 = vmatprep.subr.mxu0 0.0
    %251 = vmatpush1.msra.mxu0 0.0
    %252 = vmatprep.subr.mxu0 0.0
    %253 = vmatpush1.msra.mxu0 0.0
    %254 = vmatprep.subr.mxu0 0.0
    %255 = vmatpush1.msra.mxu0 0.0
    %256 = vmatprep.subr.mxu0 0.0
    %257 = vmatpush1.msra.mxu0 0.0
    %258 = vmatprep.subr.mxu0 0.0
    %259 = vmatpush1.msra.mxu0 %v228
    %260 = vmatprep.subr.mxu0 0.0
    %261 = vmatpush1.msra.mxu0 %v227
    %262 = vmatprep.subr.mxu0 0.0
    %263 = vmatpush1.msra.mxu0 %v226
    %264 = vmatprep.subr.mxu0 0.0
    %265 = vmatpush1.msra.mxu0 %v225
    %266 = vmatprep.subr.mxu0 0.0
    %267 = vmatpush2.msra.mxu0 0.0
    %268 = vmatprep.subr.mxu0 0.0
    %269 = vmatpush2.msra.mxu0 0.0
    %270 = vmatprep.subr.mxu0 0.0
    %271 = vmatpush2.msra.mxu0 0.0
    %272 = vmatprep.subr.mxu0 0.0
    %273 = vmatpush2.msra.mxu0 0.0
    %274 = vmatprep.subr.mxu0 0.0
    %275 = vmatpush2.msra.mxu0 0.0
    %276 = vmatprep.subr.mxu0 0.0
    %277 = vmatpush2.msra.mxu0 0.0
    %278 = vmatprep.subr.mxu0 0.0
    %279 = vmatpush2.msra.mxu0 0.0
    %280 = vmatprep.subr.mxu0 0.0
    %281 = vmatpush2.msra.mxu0 0.0
    %282 = vmatprep.subr.mxu0 0.0
    %283 = vmatpush2.msra.mxu0 0.0
    %284 = vmatprep.subr.mxu0 0.0
    %285 = vmatpush2.msra.mxu0 0.0
    %286 = vmatprep.subr.mxu0 0.0
    %287 = vmatpush2.msra.mxu0 0.0
    %288 = vmatprep.subr.mxu0 0.0
    %289 = vmatpush2.msra.mxu0 0.0
    %290 = vmatprep.subr.mxu0 0.0
    %291 = vmatpush2.msra.mxu0 0.0
    %292 = vmatprep.subr.mxu0 0.0
    %293 = vmatpush2.msra.mxu0 0.0
    %294 = vmatprep.subr.mxu0 0.0
    %295 = vmatpush2.msra.mxu0 0.0
    %296 = vmatprep.subr.mxu0 0.0
    %297 = vmatpush2.msra.mxu0 0.0
    %298 = vmatprep.mubr.f32.mxu0 0.0
    %299 = vmatmul.mubr.f32.gmra.mxu0 %v232
    %v300 = vpop.f32.mrf.mxu0
    %v301 = vadd.f32 0.0, %v300
    %v302 = vpop.f32.mrf.mxu0
    %303 = vdwg.mxu0
    %v304 = vadd.f32 %v229, %v301
    %v305 = vxor.u32 %v304, 2147483648
    %v306 = vmul.f32 %v305, 1.442695
    %v307 = vpow.pop %v306
    %v308 = vadd.f32 %v307, 1.0
    %v309 = vrcp.pop %v308
    %v310 = vmul.f32 1.0, %v309
    %v311 = vtanh.pop %v304
    %v312 = vmul.f32 %v310, 0.0
    %314 = vrot.lane.b32.xlu0 %v311, 32
    %v315 = vpop.permute.xlu0 %314
    %v317 = vmul.f32 %v310, %v315
    %319 = vrot.lane.b32.xlu0 %v317, 32
    %v320 = vpop.permute.xlu0 %319
    %v322 = vadd.f32 %v312, %v320
    %v323 = vtanh.pop %v322
    %325 = vrot.lane.b32.xlu0 %v323, 32
    %v326 = vpop.permute.xlu0 %325
    %v328 = vmul.f32 %v310, %v326
    %330 = vrot.lane.b32.xlu0 %v328, 64
    %v331 = vpop.permute.xlu0 %330
    %333 = vst.msk [vmem:[#allocation3] sm:$0xff] %vm230, %v331
    %s334 = scalar_lea.vmem [#allocation2], 8
    %v335 = vld [vmem:[%s334] sm:$0xff]
    %v336 = vsel %vm230, %v331, 0
    %338 = vmatprep.subr.mxu0 0.0
    %339 = vmatpush1.msra.mxu0 0.0
    %340 = vmatprep.subr.mxu0 0.0
    %341 = vmatpush1.msra.mxu0 0.0
    %342 = vmatprep.subr.mxu0 0.0
    %343 = vmatpush1.msra.mxu0 0.0
    %344 = vmatprep.subr.mxu0 0.0
    %345 = vmatpush1.msra.mxu0 0.0
    %346 = vmatprep.subr.mxu0 0.0
    %347 = vmatpush1.msra.mxu0 0.0
    %348 = vmatprep.subr.mxu0 0.0
    %349 = vmatpush1.msra.mxu0 0.0
    %350 = vmatprep.subr.mxu0 0.0
    %351 = vmatpush1.msra.mxu0 0.0
    %352 = vmatprep.subr.mxu0 0.0
    %353 = vmatpush1.msra.mxu0 0.0
    %354 = vmatprep.subr.mxu0 0.0
    %355 = vmatpush1.msra.mxu0 0.0
    %356 = vmatprep.subr.mxu0 0.0
    %357 = vmatpush1.msra.mxu0 0.0
    %358 = vmatprep.subr.mxu0 0.0
    %359 = vmatpush1.msra.mxu0 0.0
    %360 = vmatprep.subr.mxu0 0.0
    %361 = vmatpush1.msra.mxu0 0.0
    %362 = vmatprep.subr.mxu0 0.0
    %363 = vmatpush1.msra.mxu0 %v228
    %364 = vmatprep.subr.mxu0 0.0
    %365 = vmatpush1.msra.mxu0 %v227
    %366 = vmatprep.subr.mxu0 0.0
    %367 = vmatpush1.msra.mxu0 %v226
    %368 = vmatprep.subr.mxu0 0.0
    %369 = vmatpush1.msra.mxu0 %v225
    %370 = vmatprep.subr.mxu0 0.0
    %371 = vmatpush2.msra.mxu0 0.0
    %372 = vmatprep.subr.mxu0 0.0
    %373 = vmatpush2.msra.mxu0 0.0
    %374 = vmatprep.subr.mxu0 0.0
    %375 = vmatpush2.msra.mxu0 0.0
    %376 = vmatprep.subr.mxu0 0.0
    %377 = vmatpush2.msra.mxu0 0.0
    %378 = vmatprep.subr.mxu0 0.0
    %379 = vmatpush2.msra.mxu0 0.0
    %380 = vmatprep.subr.mxu0 0.0
    %381 = vmatpush2.msra.mxu0 0.0
    %382 = vmatprep.subr.mxu0 0.0
    %383 = vmatpush2.msra.mxu0 0.0
    %384 = vmatprep.subr.mxu0 0.0
    %385 = vmatpush2.msra.mxu0 0.0
    %386 = vmatprep.subr.mxu0 0.0
    %387 = vmatpush2.msra.mxu0 0.0
    %388 = vmatprep.subr.mxu0 0.0
    %389 = vmatpush2.msra.mxu0 0.0
    %390 = vmatprep.subr.mxu0 0.0
    %391 = vmatpush2.msra.mxu0 0.0
    %392 = vmatprep.subr.mxu0 0.0
    %393 = vmatpush2.msra.mxu0 0.0
    %394 = vmatprep.subr.mxu0 0.0
    %395 = vmatpush2.msra.mxu0 0.0
    %396 = vmatprep.subr.mxu0 0.0
    %397 = vmatpush2.msra.mxu0 0.0
    %398 = vmatprep.subr.mxu0 0.0
    %399 = vmatpush2.msra.mxu0 0.0
    %400 = vmatprep.subr.mxu0 0.0
    %401 = vmatpush2.msra.mxu0 0.0
    %402 = vmatprep.mubr.f32.mxu0 0.0
    %403 = vmatmul.mubr.f32.gmra.mxu0 %v336
    %v404 = vpop.f32.mrf.mxu0
    %v405 = vadd.f32 0.0, %v404
    %v406 = vpop.f32.mrf.mxu0
    %407 = vdwg.mxu0
    %v408 = vadd.f32 %v335, %v405
    %v409 = vxor.u32 %v408, 2147483648
    %v410 = vmul.f32 %v409, 1.442695
    %v411 = vpow.pop %v410
    %v412 = vadd.f32 %v411, 1.0
    %v413 = vrcp.pop %v412
    %v414 = vmul.f32 1.0, %v413
    %v415 = vtanh.pop %v408
    %v416 = vmul.f32 %v414, %v322
    %418 = vrot.lane.b32.xlu0 %v415, 32
    %v419 = vpop.permute.xlu0 %418
    %v421 = vmul.f32 %v414, %v419
    %423 = vrot.lane.b32.xlu0 %v421, 32
    %v424 = vpop.permute.xlu0 %423
    %v426 = vadd.f32 %v416, %v424
    %v427 = vtanh.pop %v426
    %429 = vrot.lane.b32.xlu0 %v427, 32
    %v430 = vpop.permute.xlu0 %429
    %v432 = vmul.f32 %v414, %v430
    %434 = vrot.lane.b32.xlu0 %v432, 64
    %v435 = vpop.permute.xlu0 %434
    %s437 = scalar_lea.vmem [#allocation3], 8
    %438 = vst.msk [vmem:[%s437] sm:$0xff] %vm230, %v435
    %s439 = scalar_lea.vmem [#allocation2], 16
    %v440 = vld [vmem:[%s439] sm:$0xff]
    %v441 = vsel %vm230, %v435, 0
    %443 = vmatprep.subr.mxu0 0.0
    %444 = vmatpush1.msra.mxu0 0.0
    %445 = vmatprep.subr.mxu0 0.0
    %446 = vmatpush1.msra.mxu0 0.0
    %447 = vmatprep.subr.mxu0 0.0
    %448 = vmatpush1.msra.mxu0 0.0
    %449 = vmatprep.subr.mxu0 0.0
    %450 = vmatpush1.msra.mxu0 0.0
    %451 = vmatprep.subr.mxu0 0.0
    %452 = vmatpush1.msra.mxu0 0.0
    %453 = vmatprep.subr.mxu0 0.0
    %454 = vmatpush1.msra.mxu0 0.0
    %455 = vmatprep.subr.mxu0 0.0
    %456 = vmatpush1.msra.mxu0 0.0
    %457 = vmatprep.subr.mxu0 0.0
    %458 = vmatpush1.msra.mxu0 0.0
    %459 = vmatprep.subr.mxu0 0.0
    %460 = vmatpush1.msra.mxu0 0.0
    %461 = vmatprep.subr.mxu0 0.0
    %462 = vmatpush1.msra.mxu0 0.0
    %463 = vmatprep.subr.mxu0 0.0
    %464 = vmatpush1.msra.mxu0 0.0
    %465 = vmatprep.subr.mxu0 0.0
    %466 = vmatpush1.msra.mxu0 0.0
    %467 = vmatprep.subr.mxu0 0.0
    %468 = vmatpush1.msra.mxu0 %v228
    %469 = vmatprep.subr.mxu0 0.0
    %470 = vmatpush1.msra.mxu0 %v227
    %471 = vmatprep.subr.mxu0 0.0
    %472 = vmatpush1.msra.mxu0 %v226
    %473 = vmatprep.subr.mxu0 0.0
    %474 = vmatpush1.msra.mxu0 %v225
    %475 = vmatprep.subr.mxu0 0.0
    %476 = vmatpush2.msra.mxu0 0.0
    %477 = vmatprep.subr.mxu0 0.0
    %478 = vmatpush2.msra.mxu0 0.0
    %479 = vmatprep.subr.mxu0 0.0
    %480 = vmatpush2.msra.mxu0 0.0
    %481 = vmatprep.subr.mxu0 0.0
    %482 = vmatpush2.msra.mxu0 0.0
    %483 = vmatprep.subr.mxu0 0.0
    %484 = vmatpush2.msra.mxu0 0.0
    %485 = vmatprep.subr.mxu0 0.0
    %486 = vmatpush2.msra.mxu0 0.0
    %487 = vmatprep.subr.mxu0 0.0
    %488 = vmatpush2.msra.mxu0 0.0
    %489 = vmatprep.subr.mxu0 0.0
    %490 = vmatpush2.msra.mxu0 0.0
    %491 = vmatprep.subr.mxu0 0.0
    %492 = vmatpush2.msra.mxu0 0.0
    %493 = vmatprep.subr.mxu0 0.0
    %494 = vmatpush2.msra.mxu0 0.0
    %495 = vmatprep.subr.mxu0 0.0
    %496 = vmatpush2.msra.mxu0 0.0
    %497 = vmatprep.subr.mxu0 0.0
    %498 = vmatpush2.msra.mxu0 0.0
    %499 = vmatprep.subr.mxu0 0.0
    %500 = vmatpush2.msra.mxu0 0.0
    %501 = vmatprep.subr.mxu0 0.0
    %502 = vmatpush2.msra.mxu0 0.0
    %503 = vmatprep.subr.mxu0 0.0
    %504 = vmatpush2.msra.mxu0 0.0
    %505 = vmatprep.subr.mxu0 0.0
    %506 = vmatpush2.msra.mxu0 0.0
    %507 = vmatprep.mubr.f32.mxu0 0.0
    %508 = vmatmul.mubr.f32.gmra.mxu0 %v441
    %v509 = vpop.f32.mrf.mxu0
    %v510 = vadd.f32 0.0, %v509
    %v511 = vpop.f32.mrf.mxu0
    %512 = vdwg.mxu0
    %v513 = vadd.f32 %v440, %v510
    %v514 = vxor.u32 %v513, 2147483648
    %v515 = vmul.f32 %v514, 1.442695
    %v516 = vpow.pop %v515
    %v517 = vadd.f32 %v516, 1.0
    %v518 = vrcp.pop %v517
    %v519 = vmul.f32 1.0, %v518
    %v520 = vtanh.pop %v513
    %v521 = vmul.f32 %v519, %v426
    %523 = vrot.lane.b32.xlu0 %v520, 32
    %v524 = vpop.permute.xlu0 %523
    %v526 = vmul.f32 %v519, %v524
    %528 = vrot.lane.b32.xlu0 %v526, 32
    %v529 = vpop.permute.xlu0 %528
    %v531 = vadd.f32 %v521, %v529
    %v532 = vtanh.pop %v531
    %534 = vrot.lane.b32.xlu0 %v532, 32
    %v535 = vpop.permute.xlu0 %534
    %v537 = vmul.f32 %v519, %v535
    %539 = vrot.lane.b32.xlu0 %v537, 64
    %v540 = vpop.permute.xlu0 %539
    %s542 = scalar_lea.vmem [#allocation3], 16
    %543 = vst.msk [vmem:[%s542] sm:$0xff] %vm230, %v540
    %s544 = scalar_lea.vmem [#allocation2], 24
    %v545 = vld [vmem:[%s544] sm:$0xff]
    %v546 = vsel %vm230, %v540, 0
    %548 = vmatprep.subr.mxu0 0.0
    %549 = vmatpush1.msra.mxu0 0.0
    %550 = vmatprep.subr.mxu0 0.0
    %551 = vmatpush1.msra.mxu0 0.0
    %552 = vmatprep.subr.mxu0 0.0
    %553 = vmatpush1.msra.mxu0 0.0
    %554 = vmatprep.subr.mxu0 0.0
    %555 = vmatpush1.msra.mxu0 0.0
    %556 = vmatprep.subr.mxu0 0.0
    %557 = vmatpush1.msra.mxu0 0.0
    %558 = vmatprep.subr.mxu0 0.0
    %559 = vmatpush1.msra.mxu0 0.0
    %560 = vmatprep.subr.mxu0 0.0
    %561 = vmatpush1.msra.mxu0 0.0
    %562 = vmatprep.subr.mxu0 0.0
    %563 = vmatpush1.msra.mxu0 0.0
    %564 = vmatprep.subr.mxu0 0.0
    %565 = vmatpush1.msra.mxu0 0.0
    %566 = vmatprep.subr.mxu0 0.0
    %567 = vmatpush1.msra.mxu0 0.0
    %568 = vmatprep.subr.mxu0 0.0
    %569 = vmatpush1.msra.mxu0 0.0
    %570 = vmatprep.subr.mxu0 0.0
    %571 = vmatpush1.msra.mxu0 0.0
    %572 = vmatprep.subr.mxu0 0.0
    %573 = vmatpush1.msra.mxu0 %v228
    %574 = vmatprep.subr.mxu0 0.0
    %575 = vmatpush1.msra.mxu0 %v227
    %576 = vmatprep.subr.mxu0 0.0
    %577 = vmatpush1.msra.mxu0 %v226
    %578 = vmatprep.subr.mxu0 0.0
    %579 = vmatpush1.msra.mxu0 %v225
    %580 = vmatprep.subr.mxu0 0.0
    %581 = vmatpush2.msra.mxu0 0.0
    %582 = vmatprep.subr.mxu0 0.0
    %583 = vmatpush2.msra.mxu0 0.0
    %584 = vmatprep.subr.mxu0 0.0
    %585 = vmatpush2.msra.mxu0 0.0
    %586 = vmatprep.subr.mxu0 0.0
    %587 = vmatpush2.msra.mxu0 0.0
    %588 = vmatprep.subr.mxu0 0.0
    %589 = vmatpush2.msra.mxu0 0.0
    %590 = vmatprep.subr.mxu0 0.0
    %591 = vmatpush2.msra.mxu0 0.0
    %592 = vmatprep.subr.mxu0 0.0
    %593 = vmatpush2.msra.mxu0 0.0
    %594 = vmatprep.subr.mxu0 0.0
    %595 = vmatpush2.msra.mxu0 0.0
    %596 = vmatprep.subr.mxu0 0.0
    %597 = vmatpush2.msra.mxu0 0.0
    %598 = vmatprep.subr.mxu0 0.0
    %599 = vmatpush2.msra.mxu0 0.0
    %600 = vmatprep.subr.mxu0 0.0
    %601 = vmatpush2.msra.mxu0 0.0
    %602 = vmatprep.subr.mxu0 0.0
    %603 = vmatpush2.msra.mxu0 0.0
    %604 = vmatprep.subr.mxu0 0.0
    %605 = vmatpush2.msra.mxu0 0.0
    %606 = vmatprep.subr.mxu0 0.0
    %607 = vmatpush2.msra.mxu0 0.0
    %608 = vmatprep.subr.mxu0 0.0
    %609 = vmatpush2.msra.mxu0 0.0
    %610 = vmatprep.subr.mxu0 0.0
    %611 = vmatpush2.msra.mxu0 0.0
    %612 = vmatprep.mubr.f32.mxu0 0.0
    %613 = vmatmul.mubr.f32.gmra.mxu0 %v546
    %v614 = vpop.f32.mrf.mxu0
    %v615 = vadd.f32 0.0, %v614
    %v616 = vpop.f32.mrf.mxu0
    %617 = vdwg.mxu0
    %v618 = vadd.f32 %v545, %v615
    %v619 = vxor.u32 %v618, 2147483648
    %v620 = vmul.f32 %v619, 1.442695
    %v621 = vpow.pop %v620
    %v622 = vadd.f32 %v621, 1.0
    %v623 = vrcp.pop %v622
    %v624 = vmul.f32 1.0, %v623
    %v625 = vtanh.pop %v618
    %v626 = vmul.f32 %v624, %v531
    %628 = vrot.lane.b32.xlu0 %v625, 32
    %v629 = vpop.permute.xlu0 %628
    %v631 = vmul.f32 %v624, %v629
    %633 = vrot.lane.b32.xlu0 %v631, 32
    %v634 = vpop.permute.xlu0 %633
    %v636 = vadd.f32 %v626, %v634
    %v637 = vtanh.pop %v636
    %639 = vrot.lane.b32.xlu0 %v637, 32
    %v640 = vpop.permute.xlu0 %639
    %v642 = vmul.f32 %v624, %v640
    %644 = vrot.lane.b32.xlu0 %v642, 64
    %v645 = vpop.permute.xlu0 %644
    %s647 = scalar_lea.vmem [#allocation3], 24
    %648 = vst.msk [vmem:[%s647] sm:$0xff] %vm230, %v645
    %s649 = scalar_lea.vmem [#allocation2], 32
    %v650 = vld [vmem:[%s649] sm:$0xff]
    %v651 = vsel %vm230, %v645, 0
    %653 = vmatprep.subr.mxu0 0.0
    %654 = vmatpush1.msra.mxu0 0.0
    %655 = vmatprep.subr.mxu0 0.0
    %656 = vmatpush1.msra.mxu0 0.0
    %657 = vmatprep.subr.mxu0 0.0
    %658 = vmatpush1.msra.mxu0 0.0
    %659 = vmatprep.subr.mxu0 0.0
    %660 = vmatpush1.msra.mxu0 0.0
    %661 = vmatprep.subr.mxu0 0.0
    %662 = vmatpush1.msra.mxu0 0.0
    %663 = vmatprep.subr.mxu0 0.0
    %664 = vmatpush1.msra.mxu0 0.0
    %665 = vmatprep.subr.mxu0 0.0
    %666 = vmatpush1.msra.mxu0 0.0
    %667 = vmatprep.subr.mxu0 0.0
    %668 = vmatpush1.msra.mxu0 0.0
    %669 = vmatprep.subr.mxu0 0.0
    %670 = vmatpush1.msra.mxu0 0.0
    %671 = vmatprep.subr.mxu0 0.0
    %672 = vmatpush1.msra.mxu0 0.0
    %673 = vmatprep.subr.mxu0 0.0
    %674 = vmatpush1.msra.mxu0 0.0
    %675 = vmatprep.subr.mxu0 0.0
    %676 = vmatpush1.msra.mxu0 0.0
    %677 = vmatprep.subr.mxu0 0.0
    %678 = vmatpush1.msra.mxu0 %v228
    %679 = vmatprep.subr.mxu0 0.0
    %680 = vmatpush1.msra.mxu0 %v227
    %681 = vmatprep.subr.mxu0 0.0
    %682 = vmatpush1.msra.mxu0 %v226
    %683 = vmatprep.subr.mxu0 0.0
    %684 = vmatpush1.msra.mxu0 %v225
    %685 = vmatprep.subr.mxu0 0.0
    %686 = vmatpush2.msra.mxu0 0.0
    %687 = vmatprep.subr.mxu0 0.0
    %688 = vmatpush2.msra.mxu0 0.0
    %689 = vmatprep.subr.mxu0 0.0
    %690 = vmatpush2.msra.mxu0 0.0
    %691 = vmatprep.subr.mxu0 0.0
    %692 = vmatpush2.msra.mxu0 0.0
    %693 = vmatprep.subr.mxu0 0.0
    %694 = vmatpush2.msra.mxu0 0.0
    %695 = vmatprep.subr.mxu0 0.0
    %696 = vmatpush2.msra.mxu0 0.0
    %697 = vmatprep.subr.mxu0 0.0
    %698 = vmatpush2.msra.mxu0 0.0
    %699 = vmatprep.subr.mxu0 0.0
    %700 = vmatpush2.msra.mxu0 0.0
    %701 = vmatprep.subr.mxu0 0.0
    %702 = vmatpush2.msra.mxu0 0.0
    %703 = vmatprep.subr.mxu0 0.0
    %704 = vmatpush2.msra.mxu0 0.0
    %705 = vmatprep.subr.mxu0 0.0
    %706 = vmatpush2.msra.mxu0 0.0
    %707 = vmatprep.subr.mxu0 0.0
    %708 = vmatpush2.msra.mxu0 0.0
    %709 = vmatprep.subr.mxu0 0.0
    %710 = vmatpush2.msra.mxu0 0.0
    %711 = vmatprep.subr.mxu0 0.0
    %712 = vmatpush2.msra.mxu0 0.0
    %713 = vmatprep.subr.mxu0 0.0
    %714 = vmatpush2.msra.mxu0 0.0
    %715 = vmatprep.subr.mxu0 0.0
    %716 = vmatpush2.msra.mxu0 0.0
    %717 = vmatprep.mubr.f32.mxu0 0.0
    %718 = vmatmul.mubr.f32.gmra.mxu0 %v651
    %v719 = vpop.f32.mrf.mxu0
    %v720 = vadd.f32 0.0, %v719
    %v721 = vpop.f32.mrf.mxu0
    %722 = vdwg.mxu0
    %v723 = vadd.f32 %v650, %v720
    %v724 = vxor.u32 %v723, 2147483648
    %v725 = vmul.f32 %v724, 1.442695
    %v726 = vpow.pop %v725
    %v727 = vadd.f32 %v726, 1.0
    %v728 = vrcp.pop %v727
    %v729 = vmul.f32 1.0, %v728
    %v730 = vtanh.pop %v723
    %v731 = vmul.f32 %v729, %v636
    %733 = vrot.lane.b32.xlu0 %v730, 32
    %v734 = vpop.permute.xlu0 %733
    %v736 = vmul.f32 %v729, %v734
    %738 = vrot.lane.b32.xlu0 %v736, 32
    %v739 = vpop.permute.xlu0 %738
    %v741 = vadd.f32 %v731, %v739
    %v742 = vtanh.pop %v741
    %744 = vrot.lane.b32.xlu0 %v742, 32
    %v745 = vpop.permute.xlu0 %744
    %v747 = vmul.f32 %v729, %v745
    %749 = vrot.lane.b32.xlu0 %v747, 64
    %v750 = vpop.permute.xlu0 %749
    %s752 = scalar_lea.vmem [#allocation3], 32
    %753 = vst.msk [vmem:[%s752] sm:$0xff] %vm230, %v750
    %s754 = scalar_lea.vmem [#allocation2], 40
    %v755 = vld [vmem:[%s754] sm:$0xff]
    %v756 = vsel %vm230, %v750, 0
    %758 = vmatprep.subr.mxu0 0.0
    %759 = vmatpush1.msra.mxu0 0.0
    %760 = vmatprep.subr.mxu0 0.0
    %761 = vmatpush1.msra.mxu0 0.0
    %762 = vmatprep.subr.mxu0 0.0
    %763 = vmatpush1.msra.mxu0 0.0
    %764 = vmatprep.subr.mxu0 0.0
    %765 = vmatpush1.msra.mxu0 0.0
    %766 = vmatprep.subr.mxu0 0.0
    %767 = vmatpush1.msra.mxu0 0.0
    %768 = vmatprep.subr.mxu0 0.0
    %769 = vmatpush1.msra.mxu0 0.0
    %770 = vmatprep.subr.mxu0 0.0
    %771 = vmatpush1.msra.mxu0 0.0
    %772 = vmatprep.subr.mxu0 0.0
    %773 = vmatpush1.msra.mxu0 0.0
    %774 = vmatprep.subr.mxu0 0.0
    %775 = vmatpush1.msra.mxu0 0.0
    %776 = vmatprep.subr.mxu0 0.0
    %777 = vmatpush1.msra.mxu0 0.0
    %778 = vmatprep.subr.mxu0 0.0
    %779 = vmatpush1.msra.mxu0 0.0
    %780 = vmatprep.subr.mxu0 0.0
    %781 = vmatpush1.msra.mxu0 0.0
    %782 = vmatprep.subr.mxu0 0.0
    %783 = vmatpush1.msra.mxu0 %v228
    %784 = vmatprep.subr.mxu0 0.0
    %785 = vmatpush1.msra.mxu0 %v227
    %786 = vmatprep.subr.mxu0 0.0
    %787 = vmatpush1.msra.mxu0 %v226
    %788 = vmatprep.subr.mxu0 0.0
    %789 = vmatpush1.msra.mxu0 %v225
    %790 = vmatprep.subr.mxu0 0.0
    %791 = vmatpush2.msra.mxu0 0.0
    %792 = vmatprep.subr.mxu0 0.0
    %793 = vmatpush2.msra.mxu0 0.0
    %794 = vmatprep.subr.mxu0 0.0
    %795 = vmatpush2.msra.mxu0 0.0
    %796 = vmatprep.subr.mxu0 0.0
    %797 = vmatpush2.msra.mxu0 0.0
    %798 = vmatprep.subr.mxu0 0.0
    %799 = vmatpush2.msra.mxu0 0.0
    %800 = vmatprep.subr.mxu0 0.0
    %801 = vmatpush2.msra.mxu0 0.0
    %802 = vmatprep.subr.mxu0 0.0
    %803 = vmatpush2.msra.mxu0 0.0
    %804 = vmatprep.subr.mxu0 0.0
    %805 = vmatpush2.msra.mxu0 0.0
    %806 = vmatprep.subr.mxu0 0.0
    %807 = vmatpush2.msra.mxu0 0.0
    %808 = vmatprep.subr.mxu0 0.0
    %809 = vmatpush2.msra.mxu0 0.0
    %810 = vmatprep.subr.mxu0 0.0
    %811 = vmatpush2.msra.mxu0 0.0
    %812 = vmatprep.subr.mxu0 0.0
    %813 = vmatpush2.msra.mxu0 0.0
    %814 = vmatprep.subr.mxu0 0.0
    %815 = vmatpush2.msra.mxu0 0.0
    %816 = vmatprep.subr.mxu0 0.0
    %817 = vmatpush2.msra.mxu0 0.0
    %818 = vmatprep.subr.mxu0 0.0
    %819 = vmatpush2.msra.mxu0 0.0
    %820 = vmatprep.subr.mxu0 0.0
    %821 = vmatpush2.msra.mxu0 0.0
    %822 = vmatprep.mubr.f32.mxu0 0.0
    %823 = vmatmul.mubr.f32.gmra.mxu0 %v756
    %v824 = vpop.f32.mrf.mxu0
    %v825 = vadd.f32 0.0, %v824
    %v826 = vpop.f32.mrf.mxu0
    %827 = vdwg.mxu0
    %v828 = vadd.f32 %v755, %v825
    %v829 = vxor.u32 %v828, 2147483648
    %v830 = vmul.f32 %v829, 1.442695
    %v831 = vpow.pop %v830
    %v832 = vadd.f32 %v831, 1.0
    %v833 = vrcp.pop %v832
    %v834 = vmul.f32 1.0, %v833
    %v835 = vtanh.pop %v828
    %v836 = vmul.f32 %v834, %v741
    %838 = vrot.lane.b32.xlu0 %v835, 32
    %v839 = vpop.permute.xlu0 %838
    %v841 = vmul.f32 %v834, %v839
    %843 = vrot.lane.b32.xlu0 %v841, 32
    %v844 = vpop.permute.xlu0 %843
    %v846 = vadd.f32 %v836, %v844
    %v847 = vtanh.pop %v846
    %849 = vrot.lane.b32.xlu0 %v847, 32
    %v850 = vpop.permute.xlu0 %849
    %v852 = vmul.f32 %v834, %v850
    %854 = vrot.lane.b32.xlu0 %v852, 64
    %v855 = vpop.permute.xlu0 %854
    %s857 = scalar_lea.vmem [#allocation3], 40
    %858 = vst.msk [vmem:[%s857] sm:$0xff] %vm230, %v855
    %s859 = scalar_lea.vmem [#allocation2], 48
    %v860 = vld [vmem:[%s859] sm:$0xff]
    %v861 = vsel %vm230, %v855, 0
    %863 = vmatprep.subr.mxu0 0.0
    %864 = vmatpush1.msra.mxu0 0.0
    %865 = vmatprep.subr.mxu0 0.0
    %866 = vmatpush1.msra.mxu0 0.0
    %867 = vmatprep.subr.mxu0 0.0
    %868 = vmatpush1.msra.mxu0 0.0
    %869 = vmatprep.subr.mxu0 0.0
    %870 = vmatpush1.msra.mxu0 0.0
    %871 = vmatprep.subr.mxu0 0.0
    %872 = vmatpush1.msra.mxu0 0.0
    %873 = vmatprep.subr.mxu0 0.0
    %874 = vmatpush1.msra.mxu0 0.0
    %875 = vmatprep.subr.mxu0 0.0
    %876 = vmatpush1.msra.mxu0 0.0
    %877 = vmatprep.subr.mxu0 0.0
    %878 = vmatpush1.msra.mxu0 0.0
    %879 = vmatprep.subr.mxu0 0.0
    %880 = vmatpush1.msra.mxu0 0.0
    %881 = vmatprep.subr.mxu0 0.0
    %882 = vmatpush1.msra.mxu0 0.0
    %883 = vmatprep.subr.mxu0 0.0
    %884 = vmatpush1.msra.mxu0 0.0
    %885 = vmatprep.subr.mxu0 0.0
    %886 = vmatpush1.msra.mxu0 0.0
    %887 = vmatprep.subr.mxu0 0.0
    %888 = vmatpush1.msra.mxu0 %v228
    %889 = vmatprep.subr.mxu0 0.0
    %890 = vmatpush1.msra.mxu0 %v227
    %891 = vmatprep.subr.mxu0 0.0
    %892 = vmatpush1.msra.mxu0 %v226
    %893 = vmatprep.subr.mxu0 0.0
    %894 = vmatpush1.msra.mxu0 %v225
    %895 = vmatprep.subr.mxu0 0.0
    %896 = vmatpush2.msra.mxu0 0.0
    %897 = vmatprep.subr.mxu0 0.0
    %898 = vmatpush2.msra.mxu0 0.0
    %899 = vmatprep.subr.mxu0 0.0
    %900 = vmatpush2.msra.mxu0 0.0
    %901 = vmatprep.subr.mxu0 0.0
    %902 = vmatpush2.msra.mxu0 0.0
    %903 = vmatprep.subr.mxu0 0.0
    %904 = vmatpush2.msra.mxu0 0.0
    %905 = vmatprep.subr.mxu0 0.0
    %906 = vmatpush2.msra.mxu0 0.0
    %907 = vmatprep.subr.mxu0 0.0
    %908 = vmatpush2.msra.mxu0 0.0
    %909 = vmatprep.subr.mxu0 0.0
    %910 = vmatpush2.msra.mxu0 0.0
    %911 = vmatprep.subr.mxu0 0.0
    %912 = vmatpush2.msra.mxu0 0.0
    %913 = vmatprep.subr.mxu0 0.0
    %914 = vmatpush2.msra.mxu0 0.0
    %915 = vmatprep.subr.mxu0 0.0
    %916 = vmatpush2.msra.mxu0 0.0
    %917 = vmatprep.subr.mxu0 0.0
    %918 = vmatpush2.msra.mxu0 0.0
    %919 = vmatprep.subr.mxu0 0.0
    %920 = vmatpush2.msra.mxu0 0.0
    %921 = vmatprep.subr.mxu0 0.0
    %922 = vmatpush2.msra.mxu0 0.0
    %923 = vmatprep.subr.mxu0 0.0
    %924 = vmatpush2.msra.mxu0 0.0
    %925 = vmatprep.subr.mxu0 0.0
    %926 = vmatpush2.msra.mxu0 0.0
    %927 = vmatprep.mubr.f32.mxu0 0.0
    %928 = vmatmul.mubr.f32.gmra.mxu0 %v861
    %v929 = vpop.f32.mrf.mxu0
    %v930 = vadd.f32 0.0, %v929
    %v931 = vpop.f32.mrf.mxu0
    %932 = vdwg.mxu0
    %v933 = vadd.f32 %v860, %v930
    %v934 = vxor.u32 %v933, 2147483648
    %v935 = vmul.f32 %v934, 1.442695
    %v936 = vpow.pop %v935
    %v937 = vadd.f32 %v936, 1.0
    %v938 = vrcp.pop %v937
    %v939 = vmul.f32 1.0, %v938
    %v940 = vtanh.pop %v933
    %v941 = vmul.f32 %v939, %v846
    %943 = vrot.lane.b32.xlu0 %v940, 32
    %v944 = vpop.permute.xlu0 %943
    %v946 = vmul.f32 %v939, %v944
    %948 = vrot.lane.b32.xlu0 %v946, 32
    %v949 = vpop.permute.xlu0 %948
    %v951 = vadd.f32 %v941, %v949
    %v952 = vtanh.pop %v951
    %954 = vrot.lane.b32.xlu0 %v952, 32
    %v955 = vpop.permute.xlu0 %954
    %v957 = vmul.f32 %v939, %v955
    %959 = vrot.lane.b32.xlu0 %v957, 64
    %v960 = vpop.permute.xlu0 %959
    %s962 = scalar_lea.vmem [#allocation3], 48
    %963 = vst.msk [vmem:[%s962] sm:$0xff] %vm230, %v960
    %s964 = scalar_lea.vmem [#allocation2], 56
    %v965 = vld [vmem:[%s964] sm:$0xff]
    %v966 = vsel %vm230, %v960, 0
    %968 = vmatprep.subr.mxu0 0.0
    %969 = vmatpush1.msra.mxu0 0.0
    %970 = vmatprep.subr.mxu0 0.0
    %971 = vmatpush1.msra.mxu0 0.0
    %972 = vmatprep.subr.mxu0 0.0
    %973 = vmatpush1.msra.mxu0 0.0
    %974 = vmatprep.subr.mxu0 0.0
    %975 = vmatpush1.msra.mxu0 0.0
    %976 = vmatprep.subr.mxu0 0.0
    %977 = vmatpush1.msra.mxu0 0.0
    %978 = vmatprep.subr.mxu0 0.0
    %979 = vmatpush1.msra.mxu0 0.0
    %980 = vmatprep.subr.mxu0 0.0
    %981 = vmatpush1.msra.mxu0 0.0
    %982 = vmatprep.subr.mxu0 0.0
    %983 = vmatpush1.msra.mxu0 0.0
    %984 = vmatprep.subr.mxu0 0.0
    %985 = vmatpush1.msra.mxu0 0.0
    %986 = vmatprep.subr.mxu0 0.0
    %987 = vmatpush1.msra.mxu0 0.0
    %988 = vmatprep.subr.mxu0 0.0
    %989 = vmatpush1.msra.mxu0 0.0
    %990 = vmatprep.subr.mxu0 0.0
    %991 = vmatpush1.msra.mxu0 0.0
    %992 = vmatprep.subr.mxu0 0.0
    %993 = vmatpush1.msra.mxu0 %v228
    %994 = vmatprep.subr.mxu0 0.0
    %995 = vmatpush1.msra.mxu0 %v227
    %996 = vmatprep.subr.mxu0 0.0
    %997 = vmatpush1.msra.mxu0 %v226
    %998 = vmatprep.subr.mxu0 0.0
    %999 = vmatpush1.msra.mxu0 %v225
    %1000 = vmatprep.subr.mxu0 0.0
    %1001 = vmatpush2.msra.mxu0 0.0
    %1002 = vmatprep.subr.mxu0 0.0
    %1003 = vmatpush2.msra.mxu0 0.0
    %1004 = vmatprep.subr.mxu0 0.0
    %1005 = vmatpush2.msra.mxu0 0.0
    %1006 = vmatprep.subr.mxu0 0.0
    %1007 = vmatpush2.msra.mxu0 0.0
    %1008 = vmatprep.subr.mxu0 0.0
    %1009 = vmatpush2.msra.mxu0 0.0
    %1010 = vmatprep.subr.mxu0 0.0
    %1011 = vmatpush2.msra.mxu0 0.0
    %1012 = vmatprep.subr.mxu0 0.0
    %1013 = vmatpush2.msra.mxu0 0.0
    %1014 = vmatprep.subr.mxu0 0.0
    %1015 = vmatpush2.msra.mxu0 0.0
    %1016 = vmatprep.subr.mxu0 0.0
    %1017 = vmatpush2.msra.mxu0 0.0
    %1018 = vmatprep.subr.mxu0 0.0
    %1019 = vmatpush2.msra.mxu0 0.0
    %1020 = vmatprep.subr.mxu0 0.0
    %1021 = vmatpush2.msra.mxu0 0.0
    %1022 = vmatprep.subr.mxu0 0.0
    %1023 = vmatpush2.msra.mxu0 0.0
    %1024 = vmatprep.subr.mxu0 0.0
    %1025 = vmatpush2.msra.mxu0 0.0
    %1026 = vmatprep.subr.mxu0 0.0
    %1027 = vmatpush2.msra.mxu0 0.0
    %1028 = vmatprep.subr.mxu0 0.0
    %1029 = vmatpush2.msra.mxu0 0.0
    %1030 = vmatprep.subr.mxu0 0.0
    %1031 = vmatpush2.msra.mxu0 0.0
    %1032 = vmatprep.mubr.f32.mxu0 0.0
    %1033 = vmatmul.mubr.f32.gmra.mxu0 %v966
    %v1034 = vpop.f32.mrf.mxu0
    %v1035 = vadd.f32 0.0, %v1034
    %v1036 = vpop.f32.mrf.mxu0
    %1037 = vdwg.mxu0
    %v1038 = vadd.f32 %v965, %v1035
    %v1039 = vxor.u32 %v1038, 2147483648
    %v1040 = vmul.f32 %v1039, 1.442695
    %v1041 = vpow.pop %v1040
    %v1042 = vadd.f32 %v1041, 1.0
    %v1043 = vrcp.pop %v1042
    %v1044 = vmul.f32 1.0, %v1043
    %v1045 = vtanh.pop %v1038
    %v1046 = vmul.f32 %v1044, %v951
    %1048 = vrot.lane.b32.xlu0 %v1045, 32
    %v1049 = vpop.permute.xlu0 %1048
    %v1051 = vmul.f32 %v1044, %v1049
    %1053 = vrot.lane.b32.xlu0 %v1051, 32
    %v1054 = vpop.permute.xlu0 %1053
    %v1056 = vadd.f32 %v1046, %v1054
    %v1057 = vtanh.pop %v1056
    %1059 = vrot.lane.b32.xlu0 %v1057, 32
    %v1060 = vpop.permute.xlu0 %1059
    %v1062 = vmul.f32 %v1044, %v1060
    %1064 = vrot.lane.b32.xlu0 %v1062, 64
    %v1065 = vpop.permute.xlu0 %1064
    %s1067 = scalar_lea.vmem [#allocation3], 56
    %1068 = vst.msk [vmem:[%s1067] sm:$0xff] %vm230, %v1065
    %v1069 = vld [vmem:[%s4] sm:$0xff]
    %v1070 = vld [vmem:[%s4 + $0x8] sm:$0xff]
    %v1071 = vld [vmem:[%s4 + $0x10] sm:$0xff]
    %v1072 = vld [vmem:[%s4 + $0x18] sm:$0xff]
    %v1073 = vld [vmem:[#allocation8] sm:$0x1]
    %v1074 = vld [vmem:[#allocation3] sm:$0xff]
    %v1075 = vld [vmem:[#allocation3 + $0x8] sm:$0xff]
    %v1076 = vld [vmem:[#allocation3 + $0x10] sm:$0xff]
    %v1077 = vld [vmem:[#allocation3 + $0x18] sm:$0xff]
    %v1078 = vld [vmem:[#allocation3 + $0x20] sm:$0xff]
    %v1079 = vld [vmem:[#allocation3 + $0x28] sm:$0xff]
    %v1080 = vld [vmem:[#allocation3 + $0x30] sm:$0xff]
    %v1081 = vld [vmem:[#allocation3 + $0x38] sm:$0xff]
    %v1083 = vlaneseq
    %v1084 = vshrl.u32 %v1083, 7
    %v1085 = vsub.s32 0, %v1084
    %v1086 = vrot.slane %v1073, %v1085
    %v1089 = vsel %vm230, %v1074, 0
    %v1092 = vsel %vm230, %v1075, 0
    %v1095 = vsel %vm230, %v1076, 0
    %v1098 = vsel %vm230, %v1077, 0
    %v1101 = vsel %vm230, %v1078, 0
    %v1104 = vsel %vm230, %v1079, 0
    %v1107 = vsel %vm230, %v1080, 0
    %v1110 = vsel %vm230, %v1081, 0
    %1112 = vmatprep.subr.mxu0 0.0
    %1113 = vmatpush1.msra.mxu0 0.0
    %1114 = vmatprep.subr.mxu0 0.0
    %1115 = vmatpush1.msra.mxu0 0.0
    %1116 = vmatprep.subr.mxu0 0.0
    %1117 = vmatpush1.msra.mxu0 0.0
    %1118 = vmatprep.subr.mxu0 0.0
    %1119 = vmatpush1.msra.mxu0 0.0
    %1120 = vmatprep.subr.mxu0 0.0
    %1121 = vmatpush1.msra.mxu0 0.0
    %1122 = vmatprep.subr.mxu0 0.0
    %1123 = vmatpush1.msra.mxu0 0.0
    %1124 = vmatprep.subr.mxu0 0.0
    %1125 = vmatpush1.msra.mxu0 0.0
    %1126 = vmatprep.subr.mxu0 0.0
    %1127 = vmatpush1.msra.mxu0 0.0
    %1128 = vmatprep.subr.mxu0 0.0
    %1129 = vmatpush1.msra.mxu0 0.0
    %1130 = vmatprep.subr.mxu0 0.0
    %1131 = vmatpush1.msra.mxu0 0.0
    %1132 = vmatprep.subr.mxu0 0.0
    %1133 = vmatpush1.msra.mxu0 0.0
    %1134 = vmatprep.subr.mxu0 0.0
    %1135 = vmatpush1.msra.mxu0 0.0
    %1136 = vmatprep.subr.mxu0 0.0
    %1137 = vmatpush1.msra.mxu0 %v1072
    %1138 = vmatprep.subr.mxu0 0.0
    %1139 = vmatpush1.msra.mxu0 %v1071
    %1140 = vmatprep.subr.mxu0 0.0
    %1141 = vmatpush1.msra.mxu0 %v1070
    %1142 = vmatprep.subr.mxu0 0.0
    %1143 = vmatpush1.msra.mxu0 %v1069
    %1144 = vmatprep.subr.mxu0 0.0
    %1145 = vmatpush2.msra.mxu0 0.0
    %1146 = vmatprep.subr.mxu0 0.0
    %1147 = vmatpush2.msra.mxu0 0.0
    %1148 = vmatprep.subr.mxu0 0.0
    %1149 = vmatpush2.msra.mxu0 0.0
    %1150 = vmatprep.subr.mxu0 0.0
    %1151 = vmatpush2.msra.mxu0 0.0
    %1152 = vmatprep.subr.mxu0 0.0
    %1153 = vmatpush2.msra.mxu0 0.0
    %1154 = vmatprep.subr.mxu0 0.0
    %1155 = vmatpush2.msra.mxu0 0.0
    %1156 = vmatprep.subr.mxu0 0.0
    %1157 = vmatpush2.msra.mxu0 0.0
    %1158 = vmatprep.subr.mxu0 0.0
    %1159 = vmatpush2.msra.mxu0 0.0
    %1160 = vmatprep.subr.mxu0 0.0
    %1161 = vmatpush2.msra.mxu0 0.0
    %1162 = vmatprep.subr.mxu0 0.0
    %1163 = vmatpush2.msra.mxu0 0.0
    %1164 = vmatprep.subr.mxu0 0.0
    %1165 = vmatpush2.msra.mxu0 0.0
    %1166 = vmatprep.subr.mxu0 0.0
    %1167 = vmatpush2.msra.mxu0 0.0
    %1168 = vmatprep.subr.mxu0 0.0
    %1169 = vmatpush2.msra.mxu0 0.0
    %1170 = vmatprep.subr.mxu0 0.0
    %1171 = vmatpush2.msra.mxu0 0.0
    %1172 = vmatprep.subr.mxu0 0.0
    %1173 = vmatpush2.msra.mxu0 0.0
    %1174 = vmatprep.subr.mxu0 0.0
    %1175 = vmatpush2.msra.mxu0 0.0
    %1176 = vmatprep.mubr.f32.mxu0 0.0
    %1177 = vmatmul.mubr.f32.gmra.mxu0 %v1089
    %v1178 = vpop.f32.mrf.mxu0
    %v1179 = vadd.f32 %v1086, %v1178
    %v1180 = vpop.f32.mrf.mxu0
    %1181 = vmatprep.mubr.f32.mxu0 0.0
    %1182 = vmatmul.mubr.f32.gmra.mxu0 %v1092
    %v1183 = vpop.f32.mrf.mxu0
    %v1184 = vadd.f32 %v1086, %v1183
    %v1185 = vpop.f32.mrf.mxu0
    %1186 = vmatprep.mubr.f32.mxu0 0.0
    %1187 = vmatmul.mubr.f32.gmra.mxu0 %v1095
    %v1188 = vpop.f32.mrf.mxu0
    %v1189 = vadd.f32 %v1086, %v1188
    %v1190 = vpop.f32.mrf.mxu0
    %1191 = vmatprep.mubr.f32.mxu0 0.0
    %1192 = vmatmul.mubr.f32.gmra.mxu0 %v1098
    %v1193 = vpop.f32.mrf.mxu0
    %v1194 = vadd.f32 %v1086, %v1193
    %v1195 = vpop.f32.mrf.mxu0
    %1196 = vmatprep.mubr.f32.mxu0 0.0
    %1197 = vmatmul.mubr.f32.gmra.mxu0 %v1101
    %v1198 = vpop.f32.mrf.mxu0
    %v1199 = vadd.f32 %v1086, %v1198
    %v1200 = vpop.f32.mrf.mxu0
    %1201 = vmatprep.mubr.f32.mxu0 0.0
    %1202 = vmatmul.mubr.f32.gmra.mxu0 %v1104
    %v1203 = vpop.f32.mrf.mxu0
    %v1204 = vadd.f32 %v1086, %v1203
    %v1205 = vpop.f32.mrf.mxu0
    %1206 = vmatprep.mubr.f32.mxu0 0.0
    %1207 = vmatmul.mubr.f32.gmra.mxu0 %v1107
    %v1208 = vpop.f32.mrf.mxu0
    %v1209 = vadd.f32 %v1086, %v1208
    %v1210 = vpop.f32.mrf.mxu0
    %1211 = vmatprep.mubr.f32.mxu0 0.0
    %1212 = vmatmul.mubr.f32.gmra.mxu0 %v1110
    %v1213 = vpop.f32.mrf.mxu0
    %v1214 = vadd.f32 %v1086, %v1213
    %v1215 = vpop.f32.mrf.mxu0
    %1216 = vdwg.mxu0
    %1217 = vst [vmem:[#allocation2] sm:$0xff] %v1179
    %1218 = vst [vmem:[#allocation2 + $0x8] sm:$0xff] %v1184
    %1219 = vst [vmem:[#allocation2 + $0x10] sm:$0xff] %v1189
    %1220 = vst [vmem:[#allocation2 + $0x18] sm:$0xff] %v1194
    %1221 = vst [vmem:[#allocation2 + $0x20] sm:$0xff] %v1199
    %1222 = vst [vmem:[#allocation2 + $0x28] sm:$0xff] %v1204
    %1223 = vst [vmem:[#allocation2 + $0x30] sm:$0xff] %v1209
    %1224 = vst [vmem:[#allocation2 + $0x38] sm:$0xff] %v1214
    %v1225 = vld [vmem:[%s5] sm:$0xff]
    %v1226 = vld [vmem:[%s5 + $0x8] sm:$0xff]
    %v1227 = vld [vmem:[%s5 + $0x10] sm:$0xff]
    %v1228 = vld [vmem:[%s5 + $0x18] sm:$0xff]
    %v1229 = vld [vmem:[#allocation2] sm:$0xff]
    %1230 = vmatprep.subr.mxu0 0.0
    %1231 = vmatpush1.msra.mxu0 0.0
    %1232 = vmatprep.subr.mxu0 0.0
    %1233 = vmatpush1.msra.mxu0 0.0
    %1234 = vmatprep.subr.mxu0 0.0
    %1235 = vmatpush1.msra.mxu0 0.0
    %1236 = vmatprep.subr.mxu0 0.0
    %1237 = vmatpush1.msra.mxu0 0.0
    %1238 = vmatprep.subr.mxu0 0.0
    %1239 = vmatpush1.msra.mxu0 0.0
    %1240 = vmatprep.subr.mxu0 0.0
    %1241 = vmatpush1.msra.mxu0 0.0
    %1242 = vmatprep.subr.mxu0 0.0
    %1243 = vmatpush1.msra.mxu0 0.0
    %1244 = vmatprep.subr.mxu0 0.0
    %1245 = vmatpush1.msra.mxu0 0.0
    %1246 = vmatprep.subr.mxu0 0.0
    %1247 = vmatpush1.msra.mxu0 0.0
    %1248 = vmatprep.subr.mxu0 0.0
    %1249 = vmatpush1.msra.mxu0 0.0
    %1250 = vmatprep.subr.mxu0 0.0
    %1251 = vmatpush1.msra.mxu0 0.0
    %1252 = vmatprep.subr.mxu0 0.0
    %1253 = vmatpush1.msra.mxu0 0.0
    %1254 = vmatprep.subr.mxu0 0.0
    %1255 = vmatpush1.msra.mxu0 %v1228
    %1256 = vmatprep.subr.mxu0 0.0
    %1257 = vmatpush1.msra.mxu0 %v1227
    %1258 = vmatprep.subr.mxu0 0.0
    %1259 = vmatpush1.msra.mxu0 %v1226
    %1260 = vmatprep.subr.mxu0 0.0
    %1261 = vmatpush1.msra.mxu0 %v1225
    %1262 = vmatprep.subr.mxu0 0.0
    %1263 = vmatpush2.msra.mxu0 0.0
    %1264 = vmatprep.subr.mxu0 0.0
    %1265 = vmatpush2.msra.mxu0 0.0
    %1266 = vmatprep.subr.mxu0 0.0
    %1267 = vmatpush2.msra.mxu0 0.0
    %1268 = vmatprep.subr.mxu0 0.0
    %1269 = vmatpush2.msra.mxu0 0.0
    %1270 = vmatprep.subr.mxu0 0.0
    %1271 = vmatpush2.msra.mxu0 0.0
    %1272 = vmatprep.subr.mxu0 0.0
    %1273 = vmatpush2.msra.mxu0 0.0
    %1274 = vmatprep.subr.mxu0 0.0
    %1275 = vmatpush2.msra.mxu0 0.0
    %1276 = vmatprep.subr.mxu0 0.0
    %1277 = vmatpush2.msra.mxu0 0.0
    %1278 = vmatprep.subr.mxu0 0.0
    %1279 = vmatpush2.msra.mxu0 0.0
    %1280 = vmatprep.subr.mxu0 0.0
    %1281 = vmatpush2.msra.mxu0 0.0
    %1282 = vmatprep.subr.mxu0 0.0
    %1283 = vmatpush2.msra.mxu0 0.0
    %1284 = vmatprep.subr.mxu0 0.0
    %1285 = vmatpush2.msra.mxu0 0.0
    %1286 = vmatprep.subr.mxu0 0.0
    %1287 = vmatpush2.msra.mxu0 0.0
    %1288 = vmatprep.subr.mxu0 0.0
    %1289 = vmatpush2.msra.mxu0 0.0
    %1290 = vmatprep.subr.mxu0 0.0
    %1291 = vmatpush2.msra.mxu0 0.0
    %1292 = vmatprep.subr.mxu0 0.0
    %1293 = vmatpush2.msra.mxu0 0.0
    %1294 = vmatprep.mubr.f32.mxu0 0.0
    %1295 = vmatmul.mubr.f32.gmra.mxu0 %v232
    %v1296 = vpop.f32.mrf.mxu0
    %v1297 = vadd.f32 0.0, %v1296
    %v1298 = vpop.f32.mrf.mxu0
    %1299 = vdwg.mxu0
    %v1300 = vadd.f32 %v1229, %v1297
    %v1301 = vxor.u32 %v1300, 2147483648
    %v1302 = vmul.f32 %v1301, 1.442695
    %v1303 = vpow.pop %v1302
    %v1304 = vadd.f32 %v1303, 1.0
    %v1305 = vrcp.pop %v1304
    %v1306 = vmul.f32 1.0, %v1305
    %v1307 = vtanh.pop %v1300
    %v1308 = vmul.f32 %v1306, 0.0
    %1310 = vrot.lane.b32.xlu0 %v1307, 32
    %v1311 = vpop.permute.xlu0 %1310
    %v1313 = vmul.f32 %v1306, %v1311
    %1315 = vrot.lane.b32.xlu0 %v1313, 32
    %v1316 = vpop.permute.xlu0 %1315
    %v1318 = vadd.f32 %v1308, %v1316
    %v1319 = vtanh.pop %v1318
    %1321 = vrot.lane.b32.xlu0 %v1319, 32
    %v1322 = vpop.permute.xlu0 %1321
    %v1324 = vmul.f32 %v1306, %v1322
    %v1325 = vld [vmem:[%s334] sm:$0xff]
    %1327 = vrot.lane.b32.xlu0 %v1324, 64
    %v1328 = vpop.permute.xlu0 %1327
    %v1329 = vsel %vm230, %v1328, 0
    %1331 = vmatprep.subr.mxu0 0.0
    %1332 = vmatpush1.msra.mxu0 0.0
    %1333 = vmatprep.subr.mxu0 0.0
    %1334 = vmatpush1.msra.mxu0 0.0
    %1335 = vmatprep.subr.mxu0 0.0
    %1336 = vmatpush1.msra.mxu0 0.0
    %1337 = vmatprep.subr.mxu0 0.0
    %1338 = vmatpush1.msra.mxu0 0.0
    %1339 = vmatprep.subr.mxu0 0.0
    %1340 = vmatpush1.msra.mxu0 0.0
    %1341 = vmatprep.subr.mxu0 0.0
    %1342 = vmatpush1.msra.mxu0 0.0
    %1343 = vmatprep.subr.mxu0 0.0
    %1344 = vmatpush1.msra.mxu0 0.0
    %1345 = vmatprep.subr.mxu0 0.0
    %1346 = vmatpush1.msra.mxu0 0.0
    %1347 = vmatprep.subr.mxu0 0.0
    %1348 = vmatpush1.msra.mxu0 0.0
    %1349 = vmatprep.subr.mxu0 0.0
    %1350 = vmatpush1.msra.mxu0 0.0
    %1351 = vmatprep.subr.mxu0 0.0
    %1352 = vmatpush1.msra.mxu0 0.0
    %1353 = vmatprep.subr.mxu0 0.0
    %1354 = vmatpush1.msra.mxu0 0.0
    %1355 = vmatprep.subr.mxu0 0.0
    %1356 = vmatpush1.msra.mxu0 %v1228
    %1357 = vmatprep.subr.mxu0 0.0
    %1358 = vmatpush1.msra.mxu0 %v1227
    %1359 = vmatprep.subr.mxu0 0.0
    %1360 = vmatpush1.msra.mxu0 %v1226
    %1361 = vmatprep.subr.mxu0 0.0
    %1362 = vmatpush1.msra.mxu0 %v1225
    %1363 = vmatprep.subr.mxu0 0.0
    %1364 = vmatpush2.msra.mxu0 0.0
    %1365 = vmatprep.subr.mxu0 0.0
    %1366 = vmatpush2.msra.mxu0 0.0
    %1367 = vmatprep.subr.mxu0 0.0
    %1368 = vmatpush2.msra.mxu0 0.0
    %1369 = vmatprep.subr.mxu0 0.0
    %1370 = vmatpush2.msra.mxu0 0.0
    %1371 = vmatprep.subr.mxu0 0.0
    %1372 = vmatpush2.msra.mxu0 0.0
    %1373 = vmatprep.subr.mxu0 0.0
    %1374 = vmatpush2.msra.mxu0 0.0
    %1375 = vmatprep.subr.mxu0 0.0
    %1376 = vmatpush2.msra.mxu0 0.0
    %1377 = vmatprep.subr.mxu0 0.0
    %1378 = vmatpush2.msra.mxu0 0.0
    %1379 = vmatprep.subr.mxu0 0.0
    %1380 = vmatpush2.msra.mxu0 0.0
    %1381 = vmatprep.subr.mxu0 0.0
    %1382 = vmatpush2.msra.mxu0 0.0
    %1383 = vmatprep.subr.mxu0 0.0
    %1384 = vmatpush2.msra.mxu0 0.0
    %1385 = vmatprep.subr.mxu0 0.0
    %1386 = vmatpush2.msra.mxu0 0.0
    %1387 = vmatprep.subr.mxu0 0.0
    %1388 = vmatpush2.msra.mxu0 0.0
    %1389 = vmatprep.subr.mxu0 0.0
    %1390 = vmatpush2.msra.mxu0 0.0
    %1391 = vmatprep.subr.mxu0 0.0
    %1392 = vmatpush2.msra.mxu0 0.0
    %1393 = vmatprep.subr.mxu0 0.0
    %1394 = vmatpush2.msra.mxu0 0.0
    %1395 = vmatprep.mubr.f32.mxu0 0.0
    %1396 = vmatmul.mubr.f32.gmra.mxu0 %v1329
    %v1397 = vpop.f32.mrf.mxu0
    %v1398 = vadd.f32 0.0, %v1397
    %v1399 = vpop.f32.mrf.mxu0
    %1400 = vdwg.mxu0
    %v1401 = vadd.f32 %v1325, %v1398
    %v1402 = vxor.u32 %v1401, 2147483648
    %v1403 = vmul.f32 %v1402, 1.442695
    %v1404 = vpow.pop %v1403
    %v1405 = vadd.f32 %v1404, 1.0
    %v1406 = vrcp.pop %v1405
    %v1407 = vmul.f32 1.0, %v1406
    %v1408 = vtanh.pop %v1401
    %v1409 = vmul.f32 %v1407, %v1318
    %1411 = vrot.lane.b32.xlu0 %v1408, 32
    %v1412 = vpop.permute.xlu0 %1411
    %v1414 = vmul.f32 %v1407, %v1412
    %1416 = vrot.lane.b32.xlu0 %v1414, 32
    %v1417 = vpop.permute.xlu0 %1416
    %v1419 = vadd.f32 %v1409, %v1417
    %v1420 = vtanh.pop %v1419
    %1422 = vrot.lane.b32.xlu0 %v1420, 32
    %v1423 = vpop.permute.xlu0 %1422
    %v1425 = vmul.f32 %v1407, %v1423
    %v1426 = vld [vmem:[%s439] sm:$0xff]
    %1428 = vrot.lane.b32.xlu0 %v1425, 64
    %v1429 = vpop.permute.xlu0 %1428
    %v1430 = vsel %vm230, %v1429, 0
    %1432 = vmatprep.subr.mxu0 0.0
    %1433 = vmatpush1.msra.mxu0 0.0
    %1434 = vmatprep.subr.mxu0 0.0
    %1435 = vmatpush1.msra.mxu0 0.0
    %1436 = vmatprep.subr.mxu0 0.0
    %1437 = vmatpush1.msra.mxu0 0.0
    %1438 = vmatprep.subr.mxu0 0.0
    %1439 = vmatpush1.msra.mxu0 0.0
    %1440 = vmatprep.subr.mxu0 0.0
    %1441 = vmatpush1.msra.mxu0 0.0
    %1442 = vmatprep.subr.mxu0 0.0
    %1443 = vmatpush1.msra.mxu0 0.0
    %1444 = vmatprep.subr.mxu0 0.0
    %1445 = vmatpush1.msra.mxu0 0.0
    %1446 = vmatprep.subr.mxu0 0.0
    %1447 = vmatpush1.msra.mxu0 0.0
    %1448 = vmatprep.subr.mxu0 0.0
    %1449 = vmatpush1.msra.mxu0 0.0
    %1450 = vmatprep.subr.mxu0 0.0
    %1451 = vmatpush1.msra.mxu0 0.0
    %1452 = vmatprep.subr.mxu0 0.0
    %1453 = vmatpush1.msra.mxu0 0.0
    %1454 = vmatprep.subr.mxu0 0.0
    %1455 = vmatpush1.msra.mxu0 0.0
    %1456 = vmatprep.subr.mxu0 0.0
    %1457 = vmatpush1.msra.mxu0 %v1228
    %1458 = vmatprep.subr.mxu0 0.0
    %1459 = vmatpush1.msra.mxu0 %v1227
    %1460 = vmatprep.subr.mxu0 0.0
    %1461 = vmatpush1.msra.mxu0 %v1226
    %1462 = vmatprep.subr.mxu0 0.0
    %1463 = vmatpush1.msra.mxu0 %v1225
    %1464 = vmatprep.subr.mxu0 0.0
    %1465 = vmatpush2.msra.mxu0 0.0
    %1466 = vmatprep.subr.mxu0 0.0
    %1467 = vmatpush2.msra.mxu0 0.0
    %1468 = vmatprep.subr.mxu0 0.0
    %1469 = vmatpush2.msra.mxu0 0.0
    %1470 = vmatprep.subr.mxu0 0.0
    %1471 = vmatpush2.msra.mxu0 0.0
    %1472 = vmatprep.subr.mxu0 0.0
    %1473 = vmatpush2.msra.mxu0 0.0
    %1474 = vmatprep.subr.mxu0 0.0
    %1475 = vmatpush2.msra.mxu0 0.0
    %1476 = vmatprep.subr.mxu0 0.0
    %1477 = vmatpush2.msra.mxu0 0.0
    %1478 = vmatprep.subr.mxu0 0.0
    %1479 = vmatpush2.msra.mxu0 0.0
    %1480 = vmatprep.subr.mxu0 0.0
    %1481 = vmatpush2.msra.mxu0 0.0
    %1482 = vmatprep.subr.mxu0 0.0
    %1483 = vmatpush2.msra.mxu0 0.0
    %1484 = vmatprep.subr.mxu0 0.0
    %1485 = vmatpush2.msra.mxu0 0.0
    %1486 = vmatprep.subr.mxu0 0.0
    %1487 = vmatpush2.msra.mxu0 0.0
    %1488 = vmatprep.subr.mxu0 0.0
    %1489 = vmatpush2.msra.mxu0 0.0
    %1490 = vmatprep.subr.mxu0 0.0
    %1491 = vmatpush2.msra.mxu0 0.0
    %1492 = vmatprep.subr.mxu0 0.0
    %1493 = vmatpush2.msra.mxu0 0.0
    %1494 = vmatprep.subr.mxu0 0.0
    %1495 = vmatpush2.msra.mxu0 0.0
    %1496 = vmatprep.mubr.f32.mxu0 0.0
    %1497 = vmatmul.mubr.f32.gmra.mxu0 %v1430
    %v1498 = vpop.f32.mrf.mxu0
    %v1499 = vadd.f32 0.0, %v1498
    %v1500 = vpop.f32.mrf.mxu0
    %1501 = vdwg.mxu0
    %v1502 = vadd.f32 %v1426, %v1499
    %v1503 = vxor.u32 %v1502, 2147483648
    %v1504 = vmul.f32 %v1503, 1.442695
    %v1505 = vpow.pop %v1504
    %v1506 = vadd.f32 %v1505, 1.0
    %v1507 = vrcp.pop %v1506
    %v1508 = vmul.f32 1.0, %v1507
    %v1509 = vtanh.pop %v1502
    %v1510 = vmul.f32 %v1508, %v1419
    %1512 = vrot.lane.b32.xlu0 %v1509, 32
    %v1513 = vpop.permute.xlu0 %1512
    %v1515 = vmul.f32 %v1508, %v1513
    %1517 = vrot.lane.b32.xlu0 %v1515, 32
    %v1518 = vpop.permute.xlu0 %1517
    %v1520 = vadd.f32 %v1510, %v1518
    %v1521 = vtanh.pop %v1520
    %1523 = vrot.lane.b32.xlu0 %v1521, 32
    %v1524 = vpop.permute.xlu0 %1523
    %v1526 = vmul.f32 %v1508, %v1524
    %v1527 = vld [vmem:[%s544] sm:$0xff]
    %1529 = vrot.lane.b32.xlu0 %v1526, 64
    %v1530 = vpop.permute.xlu0 %1529
    %v1531 = vsel %vm230, %v1530, 0
    %1533 = vmatprep.subr.mxu0 0.0
    %1534 = vmatpush1.msra.mxu0 0.0
    %1535 = vmatprep.subr.mxu0 0.0
    %1536 = vmatpush1.msra.mxu0 0.0
    %1537 = vmatprep.subr.mxu0 0.0
    %1538 = vmatpush1.msra.mxu0 0.0
    %1539 = vmatprep.subr.mxu0 0.0
    %1540 = vmatpush1.msra.mxu0 0.0
    %1541 = vmatprep.subr.mxu0 0.0
    %1542 = vmatpush1.msra.mxu0 0.0
    %1543 = vmatprep.subr.mxu0 0.0
    %1544 = vmatpush1.msra.mxu0 0.0
    %1545 = vmatprep.subr.mxu0 0.0
    %1546 = vmatpush1.msra.mxu0 0.0
    %1547 = vmatprep.subr.mxu0 0.0
    %1548 = vmatpush1.msra.mxu0 0.0
    %1549 = vmatprep.subr.mxu0 0.0
    %1550 = vmatpush1.msra.mxu0 0.0
    %1551 = vmatprep.subr.mxu0 0.0
    %1552 = vmatpush1.msra.mxu0 0.0
    %1553 = vmatprep.subr.mxu0 0.0
    %1554 = vmatpush1.msra.mxu0 0.0
    %1555 = vmatprep.subr.mxu0 0.0
    %1556 = vmatpush1.msra.mxu0 0.0
    %1557 = vmatprep.subr.mxu0 0.0
    %1558 = vmatpush1.msra.mxu0 %v1228
    %1559 = vmatprep.subr.mxu0 0.0
    %1560 = vmatpush1.msra.mxu0 %v1227
    %1561 = vmatprep.subr.mxu0 0.0
    %1562 = vmatpush1.msra.mxu0 %v1226
    %1563 = vmatprep.subr.mxu0 0.0
    %1564 = vmatpush1.msra.mxu0 %v1225
    %1565 = vmatprep.subr.mxu0 0.0
    %1566 = vmatpush2.msra.mxu0 0.0
    %1567 = vmatprep.subr.mxu0 0.0
    %1568 = vmatpush2.msra.mxu0 0.0
    %1569 = vmatprep.subr.mxu0 0.0
    %1570 = vmatpush2.msra.mxu0 0.0
    %1571 = vmatprep.subr.mxu0 0.0
    %1572 = vmatpush2.msra.mxu0 0.0
    %1573 = vmatprep.subr.mxu0 0.0
    %1574 = vmatpush2.msra.mxu0 0.0
    %1575 = vmatprep.subr.mxu0 0.0
    %1576 = vmatpush2.msra.mxu0 0.0
    %1577 = vmatprep.subr.mxu0 0.0
    %1578 = vmatpush2.msra.mxu0 0.0
    %1579 = vmatprep.subr.mxu0 0.0
    %1580 = vmatpush2.msra.mxu0 0.0
    %1581 = vmatprep.subr.mxu0 0.0
    %1582 = vmatpush2.msra.mxu0 0.0
    %1583 = vmatprep.subr.mxu0 0.0
    %1584 = vmatpush2.msra.mxu0 0.0
    %1585 = vmatprep.subr.mxu0 0.0
    %1586 = vmatpush2.msra.mxu0 0.0
    %1587 = vmatprep.subr.mxu0 0.0
    %1588 = vmatpush2.msra.mxu0 0.0
    %1589 = vmatprep.subr.mxu0 0.0
    %1590 = vmatpush2.msra.mxu0 0.0
    %1591 = vmatprep.subr.mxu0 0.0
    %1592 = vmatpush2.msra.mxu0 0.0
    %1593 = vmatprep.subr.mxu0 0.0
    %1594 = vmatpush2.msra.mxu0 0.0
    %1595 = vmatprep.subr.mxu0 0.0
    %1596 = vmatpush2.msra.mxu0 0.0
    %1597 = vmatprep.mubr.f32.mxu0 0.0
    %1598 = vmatmul.mubr.f32.gmra.mxu0 %v1531
    %v1599 = vpop.f32.mrf.mxu0
    %v1600 = vadd.f32 0.0, %v1599
    %v1601 = vpop.f32.mrf.mxu0
    %1602 = vdwg.mxu0
    %v1603 = vadd.f32 %v1527, %v1600
    %v1604 = vxor.u32 %v1603, 2147483648
    %v1605 = vmul.f32 %v1604, 1.442695
    %v1606 = vpow.pop %v1605
    %v1607 = vadd.f32 %v1606, 1.0
    %v1608 = vrcp.pop %v1607
    %v1609 = vmul.f32 1.0, %v1608
    %v1610 = vtanh.pop %v1603
    %v1611 = vmul.f32 %v1609, %v1520
    %1613 = vrot.lane.b32.xlu0 %v1610, 32
    %v1614 = vpop.permute.xlu0 %1613
    %v1616 = vmul.f32 %v1609, %v1614
    %1618 = vrot.lane.b32.xlu0 %v1616, 32
    %v1619 = vpop.permute.xlu0 %1618
    %v1621 = vadd.f32 %v1611, %v1619
    %v1622 = vtanh.pop %v1621
    %1624 = vrot.lane.b32.xlu0 %v1622, 32
    %v1625 = vpop.permute.xlu0 %1624
    %v1627 = vmul.f32 %v1609, %v1625
    %v1628 = vld [vmem:[%s649] sm:$0xff]
    %1630 = vrot.lane.b32.xlu0 %v1627, 64
    %v1631 = vpop.permute.xlu0 %1630
    %v1632 = vsel %vm230, %v1631, 0
    %1634 = vmatprep.subr.mxu0 0.0
    %1635 = vmatpush1.msra.mxu0 0.0
    %1636 = vmatprep.subr.mxu0 0.0
    %1637 = vmatpush1.msra.mxu0 0.0
    %1638 = vmatprep.subr.mxu0 0.0
    %1639 = vmatpush1.msra.mxu0 0.0
    %1640 = vmatprep.subr.mxu0 0.0
    %1641 = vmatpush1.msra.mxu0 0.0
    %1642 = vmatprep.subr.mxu0 0.0
    %1643 = vmatpush1.msra.mxu0 0.0
    %1644 = vmatprep.subr.mxu0 0.0
    %1645 = vmatpush1.msra.mxu0 0.0
    %1646 = vmatprep.subr.mxu0 0.0
    %1647 = vmatpush1.msra.mxu0 0.0
    %1648 = vmatprep.subr.mxu0 0.0
    %1649 = vmatpush1.msra.mxu0 0.0
    %1650 = vmatprep.subr.mxu0 0.0
    %1651 = vmatpush1.msra.mxu0 0.0
    %1652 = vmatprep.subr.mxu0 0.0
    %1653 = vmatpush1.msra.mxu0 0.0
    %1654 = vmatprep.subr.mxu0 0.0
    %1655 = vmatpush1.msra.mxu0 0.0
    %1656 = vmatprep.subr.mxu0 0.0
    %1657 = vmatpush1.msra.mxu0 0.0
    %1658 = vmatprep.subr.mxu0 0.0
    %1659 = vmatpush1.msra.mxu0 %v1228
    %1660 = vmatprep.subr.mxu0 0.0
    %1661 = vmatpush1.msra.mxu0 %v1227
    %1662 = vmatprep.subr.mxu0 0.0
    %1663 = vmatpush1.msra.mxu0 %v1226
    %1664 = vmatprep.subr.mxu0 0.0
    %1665 = vmatpush1.msra.mxu0 %v1225
    %1666 = vmatprep.subr.mxu0 0.0
    %1667 = vmatpush2.msra.mxu0 0.0
    %1668 = vmatprep.subr.mxu0 0.0
    %1669 = vmatpush2.msra.mxu0 0.0
    %1670 = vmatprep.subr.mxu0 0.0
    %1671 = vmatpush2.msra.mxu0 0.0
    %1672 = vmatprep.subr.mxu0 0.0
    %1673 = vmatpush2.msra.mxu0 0.0
    %1674 = vmatprep.subr.mxu0 0.0
    %1675 = vmatpush2.msra.mxu0 0.0
    %1676 = vmatprep.subr.mxu0 0.0
    %1677 = vmatpush2.msra.mxu0 0.0
    %1678 = vmatprep.subr.mxu0 0.0
    %1679 = vmatpush2.msra.mxu0 0.0
    %1680 = vmatprep.subr.mxu0 0.0
    %1681 = vmatpush2.msra.mxu0 0.0
    %1682 = vmatprep.subr.mxu0 0.0
    %1683 = vmatpush2.msra.mxu0 0.0
    %1684 = vmatprep.subr.mxu0 0.0
    %1685 = vmatpush2.msra.mxu0 0.0
    %1686 = vmatprep.subr.mxu0 0.0
    %1687 = vmatpush2.msra.mxu0 0.0
    %1688 = vmatprep.subr.mxu0 0.0
    %1689 = vmatpush2.msra.mxu0 0.0
    %1690 = vmatprep.subr.mxu0 0.0
    %1691 = vmatpush2.msra.mxu0 0.0
    %1692 = vmatprep.subr.mxu0 0.0
    %1693 = vmatpush2.msra.mxu0 0.0
    %1694 = vmatprep.subr.mxu0 0.0
    %1695 = vmatpush2.msra.mxu0 0.0
    %1696 = vmatprep.subr.mxu0 0.0
    %1697 = vmatpush2.msra.mxu0 0.0
    %1698 = vmatprep.mubr.f32.mxu0 0.0
    %1699 = vmatmul.mubr.f32.gmra.mxu0 %v1632
    %v1700 = vpop.f32.mrf.mxu0
    %v1701 = vadd.f32 0.0, %v1700
    %v1702 = vpop.f32.mrf.mxu0
    %1703 = vdwg.mxu0
    %v1704 = vadd.f32 %v1628, %v1701
    %v1705 = vxor.u32 %v1704, 2147483648
    %v1706 = vmul.f32 %v1705, 1.442695
    %v1707 = vpow.pop %v1706
    %v1708 = vadd.f32 %v1707, 1.0
    %v1709 = vrcp.pop %v1708
    %v1710 = vmul.f32 1.0, %v1709
    %v1711 = vtanh.pop %v1704
    %v1712 = vmul.f32 %v1710, %v1621
    %1714 = vrot.lane.b32.xlu0 %v1711, 32
    %v1715 = vpop.permute.xlu0 %1714
    %v1717 = vmul.f32 %v1710, %v1715
    %1719 = vrot.lane.b32.xlu0 %v1717, 32
    %v1720 = vpop.permute.xlu0 %1719
    %v1722 = vadd.f32 %v1712, %v1720
    %v1723 = vtanh.pop %v1722
    %1725 = vrot.lane.b32.xlu0 %v1723, 32
    %v1726 = vpop.permute.xlu0 %1725
    %v1728 = vmul.f32 %v1710, %v1726
    %v1729 = vld [vmem:[%s754] sm:$0xff]
    %1731 = vrot.lane.b32.xlu0 %v1728, 64
    %v1732 = vpop.permute.xlu0 %1731
    %v1733 = vsel %vm230, %v1732, 0
    %1735 = vmatprep.subr.mxu0 0.0
    %1736 = vmatpush1.msra.mxu0 0.0
    %1737 = vmatprep.subr.mxu0 0.0
    %1738 = vmatpush1.msra.mxu0 0.0
    %1739 = vmatprep.subr.mxu0 0.0
    %1740 = vmatpush1.msra.mxu0 0.0
    %1741 = vmatprep.subr.mxu0 0.0
    %1742 = vmatpush1.msra.mxu0 0.0
    %1743 = vmatprep.subr.mxu0 0.0
    %1744 = vmatpush1.msra.mxu0 0.0
    %1745 = vmatprep.subr.mxu0 0.0
    %1746 = vmatpush1.msra.mxu0 0.0
    %1747 = vmatprep.subr.mxu0 0.0
    %1748 = vmatpush1.msra.mxu0 0.0
    %1749 = vmatprep.subr.mxu0 0.0
    %1750 = vmatpush1.msra.mxu0 0.0
    %1751 = vmatprep.subr.mxu0 0.0
    %1752 = vmatpush1.msra.mxu0 0.0
    %1753 = vmatprep.subr.mxu0 0.0
    %1754 = vmatpush1.msra.mxu0 0.0
    %1755 = vmatprep.subr.mxu0 0.0
    %1756 = vmatpush1.msra.mxu0 0.0
    %1757 = vmatprep.subr.mxu0 0.0
    %1758 = vmatpush1.msra.mxu0 0.0
    %1759 = vmatprep.subr.mxu0 0.0
    %1760 = vmatpush1.msra.mxu0 %v1228
    %1761 = vmatprep.subr.mxu0 0.0
    %1762 = vmatpush1.msra.mxu0 %v1227
    %1763 = vmatprep.subr.mxu0 0.0
    %1764 = vmatpush1.msra.mxu0 %v1226
    %1765 = vmatprep.subr.mxu0 0.0
    %1766 = vmatpush1.msra.mxu0 %v1225
    %1767 = vmatprep.subr.mxu0 0.0
    %1768 = vmatpush2.msra.mxu0 0.0
    %1769 = vmatprep.subr.mxu0 0.0
    %1770 = vmatpush2.msra.mxu0 0.0
    %1771 = vmatprep.subr.mxu0 0.0
    %1772 = vmatpush2.msra.mxu0 0.0
    %1773 = vmatprep.subr.mxu0 0.0
    %1774 = vmatpush2.msra.mxu0 0.0
    %1775 = vmatprep.subr.mxu0 0.0
    %1776 = vmatpush2.msra.mxu0 0.0
    %1777 = vmatprep.subr.mxu0 0.0
    %1778 = vmatpush2.msra.mxu0 0.0
    %1779 = vmatprep.subr.mxu0 0.0
    %1780 = vmatpush2.msra.mxu0 0.0
    %1781 = vmatprep.subr.mxu0 0.0
    %1782 = vmatpush2.msra.mxu0 0.0
    %1783 = vmatprep.subr.mxu0 0.0
    %1784 = vmatpush2.msra.mxu0 0.0
    %1785 = vmatprep.subr.mxu0 0.0
    %1786 = vmatpush2.msra.mxu0 0.0
    %1787 = vmatprep.subr.mxu0 0.0
    %1788 = vmatpush2.msra.mxu0 0.0
    %1789 = vmatprep.subr.mxu0 0.0
    %1790 = vmatpush2.msra.mxu0 0.0
    %1791 = vmatprep.subr.mxu0 0.0
    %1792 = vmatpush2.msra.mxu0 0.0
    %1793 = vmatprep.subr.mxu0 0.0
    %1794 = vmatpush2.msra.mxu0 0.0
    %1795 = vmatprep.subr.mxu0 0.0
    %1796 = vmatpush2.msra.mxu0 0.0
    %1797 = vmatprep.subr.mxu0 0.0
    %1798 = vmatpush2.msra.mxu0 0.0
    %1799 = vmatprep.mubr.f32.mxu0 0.0
    %1800 = vmatmul.mubr.f32.gmra.mxu0 %v1733
    %v1801 = vpop.f32.mrf.mxu0
    %v1802 = vadd.f32 0.0, %v1801
    %v1803 = vpop.f32.mrf.mxu0
    %1804 = vdwg.mxu0
    %v1805 = vadd.f32 %v1729, %v1802
    %v1806 = vxor.u32 %v1805, 2147483648
    %v1807 = vmul.f32 %v1806, 1.442695
    %v1808 = vpow.pop %v1807
    %v1809 = vadd.f32 %v1808, 1.0
    %v1810 = vrcp.pop %v1809
    %v1811 = vmul.f32 1.0, %v1810
    %v1812 = vtanh.pop %v1805
    %v1813 = vmul.f32 %v1811, %v1722
    %1815 = vrot.lane.b32.xlu0 %v1812, 32
    %v1816 = vpop.permute.xlu0 %1815
    %v1818 = vmul.f32 %v1811, %v1816
    %1820 = vrot.lane.b32.xlu0 %v1818, 32
    %v1821 = vpop.permute.xlu0 %1820
    %v1823 = vadd.f32 %v1813, %v1821
    %v1824 = vtanh.pop %v1823
    %1826 = vrot.lane.b32.xlu0 %v1824, 32
    %v1827 = vpop.permute.xlu0 %1826
    %v1829 = vmul.f32 %v1811, %v1827
    %v1830 = vld [vmem:[%s859] sm:$0xff]
    %1832 = vrot.lane.b32.xlu0 %v1829, 64
    %v1833 = vpop.permute.xlu0 %1832
    %v1834 = vsel %vm230, %v1833, 0
    %1836 = vmatprep.subr.mxu0 0.0
    %1837 = vmatpush1.msra.mxu0 0.0
    %1838 = vmatprep.subr.mxu0 0.0
    %1839 = vmatpush1.msra.mxu0 0.0
    %1840 = vmatprep.subr.mxu0 0.0
    %1841 = vmatpush1.msra.mxu0 0.0
    %1842 = vmatprep.subr.mxu0 0.0
    %1843 = vmatpush1.msra.mxu0 0.0
    %1844 = vmatprep.subr.mxu0 0.0
    %1845 = vmatpush1.msra.mxu0 0.0
    %1846 = vmatprep.subr.mxu0 0.0
    %1847 = vmatpush1.msra.mxu0 0.0
    %1848 = vmatprep.subr.mxu0 0.0
    %1849 = vmatpush1.msra.mxu0 0.0
    %1850 = vmatprep.subr.mxu0 0.0
    %1851 = vmatpush1.msra.mxu0 0.0
    %1852 = vmatprep.subr.mxu0 0.0
    %1853 = vmatpush1.msra.mxu0 0.0
    %1854 = vmatprep.subr.mxu0 0.0
    %1855 = vmatpush1.msra.mxu0 0.0
    %1856 = vmatprep.subr.mxu0 0.0
    %1857 = vmatpush1.msra.mxu0 0.0
    %1858 = vmatprep.subr.mxu0 0.0
    %1859 = vmatpush1.msra.mxu0 0.0
    %1860 = vmatprep.subr.mxu0 0.0
    %1861 = vmatpush1.msra.mxu0 %v1228
    %1862 = vmatprep.subr.mxu0 0.0
    %1863 = vmatpush1.msra.mxu0 %v1227
    %1864 = vmatprep.subr.mxu0 0.0
    %1865 = vmatpush1.msra.mxu0 %v1226
    %1866 = vmatprep.subr.mxu0 0.0
    %1867 = vmatpush1.msra.mxu0 %v1225
    %1868 = vmatprep.subr.mxu0 0.0
    %1869 = vmatpush2.msra.mxu0 0.0
    %1870 = vmatprep.subr.mxu0 0.0
    %1871 = vmatpush2.msra.mxu0 0.0
    %1872 = vmatprep.subr.mxu0 0.0
    %1873 = vmatpush2.msra.mxu0 0.0
    %1874 = vmatprep.subr.mxu0 0.0
    %1875 = vmatpush2.msra.mxu0 0.0
    %1876 = vmatprep.subr.mxu0 0.0
    %1877 = vmatpush2.msra.mxu0 0.0
    %1878 = vmatprep.subr.mxu0 0.0
    %1879 = vmatpush2.msra.mxu0 0.0
    %1880 = vmatprep.subr.mxu0 0.0
    %1881 = vmatpush2.msra.mxu0 0.0
    %1882 = vmatprep.subr.mxu0 0.0
    %1883 = vmatpush2.msra.mxu0 0.0
    %1884 = vmatprep.subr.mxu0 0.0
    %1885 = vmatpush2.msra.mxu0 0.0
    %1886 = vmatprep.subr.mxu0 0.0
    %1887 = vmatpush2.msra.mxu0 0.0
    %1888 = vmatprep.subr.mxu0 0.0
    %1889 = vmatpush2.msra.mxu0 0.0
    %1890 = vmatprep.subr.mxu0 0.0
    %1891 = vmatpush2.msra.mxu0 0.0
    %1892 = vmatprep.subr.mxu0 0.0
    %1893 = vmatpush2.msra.mxu0 0.0
    %1894 = vmatprep.subr.mxu0 0.0
    %1895 = vmatpush2.msra.mxu0 0.0
    %1896 = vmatprep.subr.mxu0 0.0
    %1897 = vmatpush2.msra.mxu0 0.0
    %1898 = vmatprep.subr.mxu0 0.0
    %1899 = vmatpush2.msra.mxu0 0.0
    %1900 = vmatprep.mubr.f32.mxu0 0.0
    %1901 = vmatmul.mubr.f32.gmra.mxu0 %v1834
    %v1902 = vpop.f32.mrf.mxu0
    %v1903 = vadd.f32 0.0, %v1902
    %v1904 = vpop.f32.mrf.mxu0
    %1905 = vdwg.mxu0
    %v1906 = vadd.f32 %v1830, %v1903
    %v1907 = vxor.u32 %v1906, 2147483648
    %v1908 = vmul.f32 %v1907, 1.442695
    %v1909 = vpow.pop %v1908
    %v1910 = vadd.f32 %v1909, 1.0
    %v1911 = vrcp.pop %v1910
    %v1912 = vmul.f32 1.0, %v1911
    %v1913 = vtanh.pop %v1906
    %v1914 = vmul.f32 %v1912, %v1823
    %1916 = vrot.lane.b32.xlu0 %v1913, 32
    %v1917 = vpop.permute.xlu0 %1916
    %v1919 = vmul.f32 %v1912, %v1917
    %1921 = vrot.lane.b32.xlu0 %v1919, 32
    %v1922 = vpop.permute.xlu0 %1921
    %v1924 = vadd.f32 %v1914, %v1922
    %v1925 = vtanh.pop %v1924
    %1927 = vrot.lane.b32.xlu0 %v1925, 32
    %v1928 = vpop.permute.xlu0 %1927
    %v1930 = vmul.f32 %v1912, %v1928
    %v1931 = vld [vmem:[%s964] sm:$0xff]
    %1933 = vrot.lane.b32.xlu0 %v1930, 64
    %v1934 = vpop.permute.xlu0 %1933
    %v1935 = vsel %vm230, %v1934, 0
    %1937 = vmatprep.subr.mxu0 0.0
    %1938 = vmatpush1.msra.mxu0 0.0
    %1939 = vmatprep.subr.mxu0 0.0
    %1940 = vmatpush1.msra.mxu0 0.0
    %1941 = vmatprep.subr.mxu0 0.0
    %1942 = vmatpush1.msra.mxu0 0.0
    %1943 = vmatprep.subr.mxu0 0.0
    %1944 = vmatpush1.msra.mxu0 0.0
    %1945 = vmatprep.subr.mxu0 0.0
    %1946 = vmatpush1.msra.mxu0 0.0
    %1947 = vmatprep.subr.mxu0 0.0
    %1948 = vmatpush1.msra.mxu0 0.0
    %1949 = vmatprep.subr.mxu0 0.0
    %1950 = vmatpush1.msra.mxu0 0.0
    %1951 = vmatprep.subr.mxu0 0.0
    %1952 = vmatpush1.msra.mxu0 0.0
    %1953 = vmatprep.subr.mxu0 0.0
    %1954 = vmatpush1.msra.mxu0 0.0
    %1955 = vmatprep.subr.mxu0 0.0
    %1956 = vmatpush1.msra.mxu0 0.0
    %1957 = vmatprep.subr.mxu0 0.0
    %1958 = vmatpush1.msra.mxu0 0.0
    %1959 = vmatprep.subr.mxu0 0.0
    %1960 = vmatpush1.msra.mxu0 0.0
    %1961 = vmatprep.subr.mxu0 0.0
    %1962 = vmatpush1.msra.mxu0 %v1228
    %1963 = vmatprep.subr.mxu0 0.0
    %1964 = vmatpush1.msra.mxu0 %v1227
    %1965 = vmatprep.subr.mxu0 0.0
    %1966 = vmatpush1.msra.mxu0 %v1226
    %1967 = vmatprep.subr.mxu0 0.0
    %1968 = vmatpush1.msra.mxu0 %v1225
    %1969 = vmatprep.subr.mxu0 0.0
    %1970 = vmatpush2.msra.mxu0 0.0
    %1971 = vmatprep.subr.mxu0 0.0
    %1972 = vmatpush2.msra.mxu0 0.0
    %1973 = vmatprep.subr.mxu0 0.0
    %1974 = vmatpush2.msra.mxu0 0.0
    %1975 = vmatprep.subr.mxu0 0.0
    %1976 = vmatpush2.msra.mxu0 0.0
    %1977 = vmatprep.subr.mxu0 0.0
    %1978 = vmatpush2.msra.mxu0 0.0
    %1979 = vmatprep.subr.mxu0 0.0
    %1980 = vmatpush2.msra.mxu0 0.0
    %1981 = vmatprep.subr.mxu0 0.0
    %1982 = vmatpush2.msra.mxu0 0.0
    %1983 = vmatprep.subr.mxu0 0.0
    %1984 = vmatpush2.msra.mxu0 0.0
    %1985 = vmatprep.subr.mxu0 0.0
    %1986 = vmatpush2.msra.mxu0 0.0
    %1987 = vmatprep.subr.mxu0 0.0
    %1988 = vmatpush2.msra.mxu0 0.0
    %1989 = vmatprep.subr.mxu0 0.0
    %1990 = vmatpush2.msra.mxu0 0.0
    %1991 = vmatprep.subr.mxu0 0.0
    %1992 = vmatpush2.msra.mxu0 0.0
    %1993 = vmatprep.subr.mxu0 0.0
    %1994 = vmatpush2.msra.mxu0 0.0
    %1995 = vmatprep.subr.mxu0 0.0
    %1996 = vmatpush2.msra.mxu0 0.0
    %1997 = vmatprep.subr.mxu0 0.0
    %1998 = vmatpush2.msra.mxu0 0.0
    %1999 = vmatprep.subr.mxu0 0.0
    %2000 = vmatpush2.msra.mxu0 0.0
    %2001 = vmatprep.mubr.f32.mxu0 0.0
    %2002 = vmatmul.mubr.f32.gmra.mxu0 %v1935
    %v2003 = vpop.f32.mrf.mxu0
    %v2004 = vadd.f32 0.0, %v2003
    %v2005 = vpop.f32.mrf.mxu0
    %2006 = vdwg.mxu0
    %v2007 = vadd.f32 %v1931, %v2004
    %v2008 = vxor.u32 %v2007, 2147483648
    %v2009 = vmul.f32 %v2008, 1.442695
    %v2010 = vpow.pop %v2009
    %v2011 = vadd.f32 %v2010, 1.0
    %v2012 = vrcp.pop %v2011
    %v2013 = vmul.f32 1.0, %v2012
    %v2014 = vtanh.pop %v2007
    %v2015 = vmul.f32 %v2013, %v1924
    %2017 = vrot.lane.b32.xlu0 %v2014, 32
    %v2018 = vpop.permute.xlu0 %2017
    %v2020 = vmul.f32 %v2013, %v2018
    %2022 = vrot.lane.b32.xlu0 %v2020, 32
    %v2023 = vpop.permute.xlu0 %2022
    %v2025 = vadd.f32 %v2015, %v2023
    %v2026 = vtanh.pop %v2025
    %2028 = vrot.lane.b32.xlu0 %v2026, 32
    %v2029 = vpop.permute.xlu0 %2028
    %v2031 = vmul.f32 %v2013, %v2029
    %v2032 = vld [vmem:[%s7] sm:$0xff]
    %v2033 = vld [vmem:[%s7 + $0x8] sm:$0xff]
    %v2034 = vld [vmem:[%s7 + $0x10] sm:$0xff]
    %v2035 = vld [vmem:[%s7 + $0x18] sm:$0xff]
    %v2036 = vld [vmem:[#allocation9] sm:$0x1]
    %v2038 = vlaneseq
    %v2039 = vshrl.u32 %v2038, 7
    %v2040 = vsub.s32 0, %v2039
    %v2041 = vrot.slane %v2036, %v2040
    %2044 = vrot.lane.b32.xlu0 %v2031, 64
    %v2045 = vpop.permute.xlu0 %2044
    %v2046 = vsel %vm230, %v2045, 0
    %2048 = vmatprep.subr.mxu0 0.0
    %2049 = vmatpush1.msra.mxu0 0.0
    %2050 = vmatprep.subr.mxu0 0.0
    %2051 = vmatpush1.msra.mxu0 0.0
    %2052 = vmatprep.subr.mxu0 0.0
    %2053 = vmatpush1.msra.mxu0 0.0
    %2054 = vmatprep.subr.mxu0 0.0
    %2055 = vmatpush1.msra.mxu0 0.0
    %2056 = vmatprep.subr.mxu0 0.0
    %2057 = vmatpush1.msra.mxu0 0.0
    %2058 = vmatprep.subr.mxu0 0.0
    %2059 = vmatpush1.msra.mxu0 0.0
    %2060 = vmatprep.subr.mxu0 0.0
    %2061 = vmatpush1.msra.mxu0 0.0
    %2062 = vmatprep.subr.mxu0 0.0
    %2063 = vmatpush1.msra.mxu0 0.0
    %2064 = vmatprep.subr.mxu0 0.0
    %2065 = vmatpush1.msra.mxu0 0.0
    %2066 = vmatprep.subr.mxu0 0.0
    %2067 = vmatpush1.msra.mxu0 0.0
    %2068 = vmatprep.subr.mxu0 0.0
    %2069 = vmatpush1.msra.mxu0 0.0
    %2070 = vmatprep.subr.mxu0 0.0
    %2071 = vmatpush1.msra.mxu0 0.0
    %2072 = vmatprep.subr.mxu0 0.0
    %2073 = vmatpush1.msra.mxu0 %v2035
    %2074 = vmatprep.subr.mxu0 0.0
    %2075 = vmatpush1.msra.mxu0 %v2034
    %2076 = vmatprep.subr.mxu0 0.0
    %2077 = vmatpush1.msra.mxu0 %v2033
    %2078 = vmatprep.subr.mxu0 0.0
    %2079 = vmatpush1.msra.mxu0 %v2032
    %2080 = vmatprep.subr.mxu0 0.0
    %2081 = vmatpush2.msra.mxu0 0.0
    %2082 = vmatprep.subr.mxu0 0.0
    %2083 = vmatpush2.msra.mxu0 0.0
    %2084 = vmatprep.subr.mxu0 0.0
    %2085 = vmatpush2.msra.mxu0 0.0
    %2086 = vmatprep.subr.mxu0 0.0
    %2087 = vmatpush2.msra.mxu0 0.0
    %2088 = vmatprep.subr.mxu0 0.0
    %2089 = vmatpush2.msra.mxu0 0.0
    %2090 = vmatprep.subr.mxu0 0.0
    %2091 = vmatpush2.msra.mxu0 0.0
    %2092 = vmatprep.subr.mxu0 0.0
    %2093 = vmatpush2.msra.mxu0 0.0
    %2094 = vmatprep.subr.mxu0 0.0
    %2095 = vmatpush2.msra.mxu0 0.0
    %2096 = vmatprep.subr.mxu0 0.0
    %2097 = vmatpush2.msra.mxu0 0.0
    %2098 = vmatprep.subr.mxu0 0.0
    %2099 = vmatpush2.msra.mxu0 0.0
    %2100 = vmatprep.subr.mxu0 0.0
    %2101 = vmatpush2.msra.mxu0 0.0
    %2102 = vmatprep.subr.mxu0 0.0
    %2103 = vmatpush2.msra.mxu0 0.0
    %2104 = vmatprep.subr.mxu0 0.0
    %2105 = vmatpush2.msra.mxu0 0.0
    %2106 = vmatprep.subr.mxu0 0.0
    %2107 = vmatpush2.msra.mxu0 0.0
    %2108 = vmatprep.subr.mxu0 0.0
    %2109 = vmatpush2.msra.mxu0 0.0
    %2110 = vmatprep.subr.mxu0 0.0
    %2111 = vmatpush2.msra.mxu0 0.0
    %2112 = vmatprep.mubr.f32.mxu0 0.0
    %2113 = vmatmul.mubr.f32.gmra.mxu0 %v2046
    %v2114 = vpop.f32.mrf.mxu0
    %v2115 = vadd.f32 %v2041, %v2114
    %v2116 = vpop.f32.mrf.mxu0
    %2117 = vdwg.mxu0
    %2118 = vst [vmem:[%s9] sm:$0xff] %v2115
    // Predicated region
    $region54: #{lstm_model_forward.1} parent=1 // pred_check
      _
    $region55: #{lstm_model_forward.1} parent=1 // pred_check_branch
      %2120 = sbr.rel (0) target = $region57
    $region56: #{lstm_model_forward.1} parent=1 // pred_region
      _
    $region57: #{lstm_model_forward.1} parent=1 // pred_fallthru
      _
    // Predicated region
    $region58: #{lstm_model_forward.1} parent=1 // pred_check
      _
    $region59: #{lstm_model_forward.1} parent=1 // pred_check_branch
      %2122 = sbr.rel (0) target = $region61
    $region60: #{lstm_model_forward.1} parent=1 // pred_region
      _
    $region61: #{lstm_model_forward.1} parent=1 // pred_fallthru
      _
    %2123 = vsyncpa [#allocation5], 1
    %2124 = vsyncpa [#allocation7], 1
    %2125 = vsyncpa [#allocation10], 1

</llo_original>
